<compile_context>
chip_gen: v7x
topology: tpu7x:2x2x1
jax: 0.10.0
libtpu: 0.0.40
codegen_flags: <defaults>
</compile_context>

<pallas_src>
import functools

import jax
import jax.numpy as jnp
import numpy as np
from jax.experimental import pallas as pl
from jax.experimental.pallas import tpu as pltpu


# ---------------------------------------------------------------------------
# Shared GRU gate math (PyTorch nn.GRUCell semantics, gate order r, z, n;
# the 'n' gate applies r *inside*: n = tanh(Wx_n x + bi_n + r*(Wh_n h + bh_n)))
# gi = x @ Wx + bi , gh = h @ Wh + bh, both shaped (N, 3H).
# ---------------------------------------------------------------------------
def _gru_from_gates(gi, gh, h, H):
    r = jax.nn.sigmoid(gi[:, 0:H] + gh[:, 0:H])
    z = jax.nn.sigmoid(gi[:, H:2 * H] + gh[:, H:2 * H])
    n = jnp.tanh(gi[:, 2 * H:3 * H] + r * gh[:, 2 * H:3 * H])
    return (1.0 - z) * n + z * h


PARAM_ORDER = (
    "wx_g_u", "wx_g_q", "wh_g", "bi_g", "bh_g",      # g_cell: [U ; q_sel] -> D_g
    "wx_p_u", "wx_p_c", "wh_p", "bi_p", "bh_p",      # p_cell: [U ; c]     -> D_p
    "wx_e", "wh_e", "bi_e", "bh_e",                  # e_cell: D_p         -> D_e
    "w_att",                                         # SimpleAttention scalar (1, D_g)
)


def _dialogue_rnn_kernel(
    # per-timestep inputs
    u_ref, qmask_ref, qmask_col_ref,
    # weights (VMEM-resident across all grid steps)
    wx_g_u_ref, wx_g_q_ref, wh_g_ref, bi_g_ref, bh_g_ref,
    wx_p_u_ref, wx_p_c_ref, wh_p_ref, bi_p_ref, bh_p_ref,
    wx_e_ref, wh_e_ref, bi_e_ref, bh_e_ref,
    w_att_ref,
    # outputs
    e_out_ref, alpha_out_ref,
    # VMEM scratch (persists across the time grid)
    g_hist, q_state, e_state,
    *, B, P, D_m, D_g, D_p, D_e, T):
    f32 = jnp.float32
    t = pl.program_id(0)

    @pl.when(t == 0)
    def _init():
        g_hist[...] = jnp.zeros_like(g_hist)
        q_state[...] = jnp.zeros_like(q_state)
        e_state[...] = jnp.zeros_like(e_state)

    u = u_ref[0]                      # (B, D_m)
    qm = qmask_ref[0]                 # (B, P)
    qm_col = qmask_col_ref[0]         # (B*P, 1)  (same mask, party-flattened)
    q0 = q_state[...]                 # (B*P, D_p) party states before update

    # ---- speaker index (torch.argmax, first-max tie break) as one-hot matmuls
    party_pos = jax.lax.broadcasted_iota(jnp.int32, (B, P), 1).astype(f32)
    max_q = jnp.max(qm, axis=1, keepdims=True)
    qm_idx = jnp.min(jnp.where(qm == max_q, party_pos, jnp.float32(P)),
                     axis=1, keepdims=True)                       # (B, 1)

    cols = jax.lax.broadcasted_iota(jnp.int32, (B, B * P), 1).astype(f32)
    rows = jax.lax.broadcasted_iota(jnp.int32, (B, B * P), 0).astype(f32)
    sel = (cols == rows * P + qm_idx).astype(f32)                 # (B, B*P)

    rrow = jax.lax.broadcasted_iota(jnp.int32, (B * P, B), 0).astype(f32)
    rcol = jax.lax.broadcasted_iota(jnp.int32, (B * P, B), 1).astype(f32)
    rep = ((rrow >= rcol * P) & (rrow < (rcol + 1.0) * P)).astype(f32)  # (B*P, B)

    q0_sel = jnp.dot(sel, q0, preferred_element_type=f32)         # (B, D_p)

    # ---- global GRU: g_t = GRU([U ; q0_sel], g_{t-1}) ----------------------
    g_prev = g_hist[jnp.maximum(t - 1, 0)]                        # zeros at t == 0
    gi_g = (jnp.dot(u, wx_g_u_ref[...], preferred_element_type=f32)
            + jnp.dot(q0_sel, wx_g_q_ref[...], preferred_element_type=f32)
            + bi_g_ref[...])
    gh_g = jnp.dot(g_prev, wh_g_ref[...], preferred_element_type=f32) + bh_g_ref[...]
    g_new = _gru_from_gates(gi_g, gh_g, g_prev, D_g)              # (B, D_g)
    g_hist[t] = g_new
    # TODO(synk): nn.Dropout on g_/qs_/e_ is treated as identity (eval mode).

    # ---- SimpleAttention over history g[0..t-1] -----------------------------
    M = g_hist[...]                                               # (T, B, D_g)
    scores = jnp.sum(M * w_att_ref[...], axis=-1, keepdims=True)  # (T, B, 1)
    valid = jax.lax.broadcasted_iota(jnp.int32, (T, B, 1), 0) < t
    masked = jnp.where(valid, scores, jnp.full_like(scores, -1e30))
    smax = jnp.max(masked, axis=0, keepdims=True)
    probs = jnp.exp(masked - smax) * valid.astype(f32)
    denom = jnp.sum(probs, axis=0, keepdims=True)
    alpha = probs / jnp.where(denom > 0.0, denom, 1.0)            # (T, B, 1)
    c_ = jnp.sum(alpha * M, axis=0)                               # (B, D_g); zeros at t==0
    alpha_out_ref[...] = alpha[None]                              # (1, T, B, 1)

    # ---- party GRU: qs = GRU([U ; c] per party, q0) -------------------------
    gi_p_b = (jnp.dot(u, wx_p_u_ref[...], preferred_element_type=f32)
              + jnp.dot(c_, wx_p_c_ref[...], preferred_element_type=f32)
              + bi_p_ref[...])                                    # (B, 3*D_p)
    gi_p = jnp.dot(rep, gi_p_b, preferred_element_type=f32)       # (B*P, 3*D_p)
    gh_p = jnp.dot(q0, wh_p_ref[...], preferred_element_type=f32) + bh_p_ref[...]
    qs = _gru_from_gates(gi_p, gh_p, q0, D_p)                     # (B*P, D_p)
    # listener_state=False: non-speaking parties keep their previous state.
    q_new = q0 * (1.0 - qm_col) + qs * qm_col
    q_state[...] = q_new

    # ---- emotion GRU: e_t = GRU(q_new[speaker], e_{t-1}) --------------------
    e_prev = e_state[...]
    x_e = jnp.dot(sel, q_new, preferred_element_type=f32)         # (B, D_p)
    gi_e = jnp.dot(x_e, wx_e_ref[...], preferred_element_type=f32) + bi_e_ref[...]
    gh_e = jnp.dot(e_prev, wh_e_ref[...], preferred_element_type=f32) + bh_e_ref[...]
    e_new = _gru_from_gates(gi_e, gh_e, e_prev, D_e)              # (B, D_e)
    e_state[...] = e_new
    e_out_ref[0] = e_new


@jax.jit
def dialogue_rnn_forward(U, qmask, params):
    """U: (T, B, D_m), qmask: (T, B, P) one-hot speaker mask.

    Returns:
      e     : (T, B, D_e)  emotion states per step.
      alpha : (T, B, T)    zero-padded attention weights (row t attends over
                           history steps j < t; row 0 is all zeros).
    """
    T, B, D_m = U.shape
    P = qmask.shape[2]
    D_g = params["wh_g"].shape[0]
    D_p = params["wh_p"].shape[0]
    D_e = params["wh_e"].shape[0]

    qmask_col = qmask.reshape(T, B * P, 1)          # layout plumbing only
    weights = [params[name] for name in PARAM_ORDER]

    kernel = functools.partial(
        _dialogue_rnn_kernel, B=B, P=P, D_m=D_m, D_g=D_g, D_p=D_p, D_e=D_e, T=T)

    data_specs = [
        pl.BlockSpec((1, B, D_m), lambda t: (t, 0, 0)),
        pl.BlockSpec((1, B, P), lambda t: (t, 0, 0)),
        pl.BlockSpec((1, B * P, 1), lambda t: (t, 0, 0)),
    ]
    # Weights: full-array blocks, constant index map -> stay resident in VMEM.
    weight_specs = [pl.BlockSpec(w.shape, lambda t: (0, 0)) for w in weights]

    out_shapes = (
        jax.ShapeDtypeStruct((T, B, D_e), jnp.float32),
        jax.ShapeDtypeStruct((T, T, B, 1), jnp.float32),
    )
    out_specs = [
        pl.BlockSpec((1, B, D_e), lambda t: (t, 0, 0)),
        pl.BlockSpec((1, T, B, 1), lambda t: (t, 0, 0, 0)),
    ]
    scratch_shapes = [
        pltpu.VMEM((T, B, D_g), jnp.float32),    # g history (attention memory)
        pltpu.VMEM((B * P, D_p), jnp.float32),   # party states q
        pltpu.VMEM((B, D_e), jnp.float32),       # emotion state e
    ]

    flops_step = 2 * (
        2 * B * (B * P) * D_p                          # speaker selections
        + (B * P) * B * 3 * D_p                        # party replication
        + B * (D_m + D_p + D_g) * 3 * D_g              # g_cell
        + B * (D_m + D_g) * 3 * D_p + (B * P) * D_p * 3 * D_p   # p_cell
        + B * (D_p + D_e) * 3 * D_e                    # e_cell
        + 2 * T * B * D_g                              # attention score + pool
    )
    bytes_weights = sum(int(np.prod(w.shape)) * 4 for w in weights)
    cost = pl.CostEstimate(
        flops=int(T * flops_step),
        transcendentals=int(T * (3 * B * D_g + 3 * B * P * D_p + 3 * B * D_e + T * B)),
        bytes_accessed=int(bytes_weights + 4 * (U.size + 2 * qmask.size
                                                + T * B * D_e + T * T * B)),
    )

    e, alpha_padded = pl.pallas_call(
        kernel,
        out_shape=out_shapes,
        grid_spec=pltpu.PrefetchScalarGridSpec(
            num_scalar_prefetch=0,
            grid=(T,),
            in_specs=data_specs + weight_specs,
            out_specs=out_specs,
            scratch_shapes=scratch_shapes,
        ),
        compiler_params=pltpu.CompilerParams(
            dimension_semantics=("arbitrary",),   # recurrence is sequential in time
        ),
        cost_estimate=cost,
    )(U, qmask, qmask_col, *weights)

    # alpha_padded[t, j, b, 0] -> (T, B, T) to mirror the reference alpha list.
    alpha = jnp.transpose(alpha_padded[..., 0], (0, 2, 1))
    return e, alpha


# ---------------------------------------------------------------------------
# Parameter init (deterministic, GRUCell-style uniform(+-1/sqrt(hidden))).
# Weights stored transposed vs. PyTorch, i.e. (in_features, 3*hidden), so the
# kernel computes x @ W;  the g/p input weights are pre-split so no in-kernel
# concatenation is needed.
# ---------------------------------------------------------------------------
def init_params(key, D_m, D_g, D_p, D_e):
    def uni(k, shape, bound):
        return jax.random.uniform(k, shape, jnp.float32, -bound, bound)

    keys = jax.random.split(key, 15)
    bg, bp, be = 1.0 / D_g ** 0.5, 1.0 / D_p ** 0.5, 1.0 / D_e ** 0.5
    return {
        "wx_g_u": uni(keys[0], (D_m, 3 * D_g), bg),
        "wx_g_q": uni(keys[1], (D_p, 3 * D_g), bg),
        "wh_g":   uni(keys[2], (D_g, 3 * D_g), bg),
        "bi_g":   uni(keys[3], (1, 3 * D_g), bg),
        "bh_g":   uni(keys[4], (1, 3 * D_g), bg),
        "wx_p_u": uni(keys[5], (D_m, 3 * D_p), bp),
        "wx_p_c": uni(keys[6], (D_g, 3 * D_p), bp),
        "wh_p":   uni(keys[7], (D_p, 3 * D_p), bp),
        "bi_p":   uni(keys[8], (1, 3 * D_p), bp),
        "bh_p":   uni(keys[9], (1, 3 * D_p), bp),
        "wx_e":   uni(keys[10], (D_p, 3 * D_e), be),
        "wh_e":   uni(keys[11], (D_e, 3 * D_e), be),
        "bi_e":   uni(keys[12], (1, 3 * D_e), be),
        "bh_e":   uni(keys[13], (1, 3 * D_e), be),
        "w_att":  jax.random.normal(keys[14], (1, D_g), jnp.float32) * 0.01,
    }


# ---------------------------------------------------------------------------
# Pure-JAX reference (direct transcription of the PyTorch forward, eval mode).
# ---------------------------------------------------------------------------
def dialogue_rnn_reference(U, qmask, params):
    T, B, D_m = U.shape
    P = qmask.shape[2]
    D_g = params["wh_g"].shape[0]
    D_p = params["wh_p"].shape[0]
    D_e = params["wh_e"].shape[0]
    hp = jax.lax.Precision.HIGHEST
    dot = lambda a, b: jnp.dot(a, b, precision=hp)

    g_hist, es = [], []
    q = jnp.zeros((B, P, D_p), jnp.float32)
    e_prev = jnp.zeros((B, D_e), jnp.float32)
    for t in range(T):
        u, qm = U[t], qmask[t]
        idx = jnp.argmax(qm, axis=1)
        q0_sel = q[jnp.arange(B), idx]
        g_prev = g_hist[-1] if g_hist else jnp.zeros((B, D_g), jnp.float32)
        gi = dot(u, params["wx_g_u"]) + dot(q0_sel, params["wx_g_q"]) + params["bi_g"]
        gh = dot(g_prev, params["wh_g"]) + params["bh_g"]
        g_ = _gru_from_gates(gi, gh, g_prev, D_g)

        if t == 0:
            c = jnp.zeros((B, D_g), jnp.float32)
        else:
            M = jnp.stack(g_hist, axis=0)
            scale = jnp.einsum("tbd,d->tb", M, params["w_att"][0], precision=hp)
            a = jax.nn.softmax(scale, axis=0)
            c = jnp.einsum("tb,tbd->bd", a, M, precision=hp)

        gi_p = dot(u, params["wx_p_u"]) + dot(c, params["wx_p_c"]) + params["bi_p"]
        gi_p = jnp.repeat(gi_p, P, axis=0)
        q_flat = q.reshape(B * P, D_p)
        gh_p = dot(q_flat, params["wh_p"]) + params["bh_p"]
        qs = _gru_from_gates(gi_p, gh_p, q_flat, D_p)
        qm_flat = qm.reshape(B * P, 1)
        q = (q_flat * (1.0 - qm_flat) + qs * qm_flat).reshape(B, P, D_p)

        x_e = q[jnp.arange(B), idx]
        gi_e = dot(x_e, params["wx_e"]) + params["bi_e"]
        gh_e = dot(e_prev, params["wh_e"]) + params["bh_e"]
        e_ = _gru_from_gates(gi_e, gh_e, e_prev, D_e)
        e_prev = e_
        es.append(e_)
        g_hist.append(g_)
    return jnp.stack(es, axis=0)


if __name__ == "__main__":
    key = jax.random.PRNGKey(0)
    T, B, P = 8, 2, 2
    D_m = D_g = D_p = D_e = 32

    key, ku, kq, kparam = jax.random.split(key, 4)
    U = jax.random.normal(ku, (T, B, D_m), jnp.float32)
    speaker = jax.random.randint(kq, (T, B), 0, P)
    qmask = jax.nn.one_hot(speaker, P, dtype=jnp.float32)       # (T, B, P)
    params = init_params(kparam, D_m, D_g, D_p, D_e)

    e, alpha = dialogue_rnn_forward(U, qmask, params)
    e = jax.block_until_ready(e)
    alpha = jax.block_until_ready(alpha)

    assert e.shape == (T, B, D_e) and e.dtype == jnp.float32, e.shape
    assert alpha.shape == (T, B, T), alpha.shape
    assert bool(jnp.all(jnp.isfinite(e)))

    e_ref = dialogue_rnn_reference(U, qmask, params)
    err = float(jnp.max(jnp.abs(e - e_ref)))
    assert err < 5e-2, f"max abs error vs pure-JAX reference: {err}"

    print("KERNEL_OK")
</pallas_src>

<mosaic_0001>
module attributes {stable_mosaic.version = 11 : i64} {
  func.func @_dialogue_rnn_kernel(%arg0: i32, %arg1: memref<1x2x32xf32, #tpu.memory_space<vmem>>, %arg2: memref<1x2x2xf32, #tpu.memory_space<vmem>>, %arg3: memref<1x4x1xf32, #tpu.memory_space<vmem>>, %arg4: memref<32x96xf32, #tpu.memory_space<vmem>>, %arg5: memref<32x96xf32, #tpu.memory_space<vmem>>, %arg6: memref<32x96xf32, #tpu.memory_space<vmem>>, %arg7: memref<1x96xf32, #tpu.memory_space<vmem>>, %arg8: memref<1x96xf32, #tpu.memory_space<vmem>>, %arg9: memref<32x96xf32, #tpu.memory_space<vmem>>, %arg10: memref<32x96xf32, #tpu.memory_space<vmem>>, %arg11: memref<32x96xf32, #tpu.memory_space<vmem>>, %arg12: memref<1x96xf32, #tpu.memory_space<vmem>>, %arg13: memref<1x96xf32, #tpu.memory_space<vmem>>, %arg14: memref<32x96xf32, #tpu.memory_space<vmem>>, %arg15: memref<32x96xf32, #tpu.memory_space<vmem>>, %arg16: memref<1x96xf32, #tpu.memory_space<vmem>>, %arg17: memref<1x96xf32, #tpu.memory_space<vmem>>, %arg18: memref<1x32xf32, #tpu.memory_space<vmem>>, %arg19: memref<1x2x32xf32, #tpu.memory_space<vmem>>, %arg20: memref<1x8x2x1xf32, #tpu.memory_space<vmem>>, %arg21: memref<8x2x32xf32, #tpu.memory_space<vmem>>, %arg22: memref<4x32xf32, #tpu.memory_space<vmem>>, %arg23: memref<2x32xf32, #tpu.memory_space<vmem>>) attributes {dimension_semantics = [#tpu.dimension_semantics<arbitrary>], iteration_bounds = array<i64: 8>, scalar_prefetch = 0 : i64, scratch_operands = 3 : i64, tpu.core_type = #tpu.core_type<tc>, window_params = [{transform_indices = @transform_0, window_bounds = array<i64: 1, 2, 32>}, {transform_indices = @transform_1, window_bounds = array<i64: 1, 2, 2>}, {transform_indices = @transform_2, window_bounds = array<i64: 1, 4, 1>}, {pipeline_mode = #tpu.pipeline_mode<synchronous>, transform_indices = @transform_3, window_bounds = array<i64: 32, 96>}, {pipeline_mode = #tpu.pipeline_mode<synchronous>, transform_indices = @transform_4, window_bounds = array<i64: 32, 96>}, {pipeline_mode = #tpu.pipeline_mode<synchronous>, transform_indices = @transform_5, window_bounds = array<i64: 32, 96>}, {pipeline_mode = #tpu.pipeline_mode<synchronous>, transform_indices = @transform_6, window_bounds = array<i64: 1, 96>}, {pipeline_mode = #tpu.pipeline_mode<synchronous>, transform_indices = @transform_7, window_bounds = array<i64: 1, 96>}, {pipeline_mode = #tpu.pipeline_mode<synchronous>, transform_indices = @transform_8, window_bounds = array<i64: 32, 96>}, {pipeline_mode = #tpu.pipeline_mode<synchronous>, transform_indices = @transform_9, window_bounds = array<i64: 32, 96>}, {pipeline_mode = #tpu.pipeline_mode<synchronous>, transform_indices = @transform_10, window_bounds = array<i64: 32, 96>}, {pipeline_mode = #tpu.pipeline_mode<synchronous>, transform_indices = @transform_11, window_bounds = array<i64: 1, 96>}, {pipeline_mode = #tpu.pipeline_mode<synchronous>, transform_indices = @transform_12, window_bounds = array<i64: 1, 96>}, {pipeline_mode = #tpu.pipeline_mode<synchronous>, transform_indices = @transform_13, window_bounds = array<i64: 32, 96>}, {pipeline_mode = #tpu.pipeline_mode<synchronous>, transform_indices = @transform_14, window_bounds = array<i64: 32, 96>}, {pipeline_mode = #tpu.pipeline_mode<synchronous>, transform_indices = @transform_15, window_bounds = array<i64: 1, 96>}, {pipeline_mode = #tpu.pipeline_mode<synchronous>, transform_indices = @transform_16, window_bounds = array<i64: 1, 96>}, {pipeline_mode = #tpu.pipeline_mode<synchronous>, transform_indices = @transform_17, window_bounds = array<i64: 1, 32>}, {transform_indices = @transform_18, window_bounds = array<i64: 1, 2, 32>}, {transform_indices = @transform_19, window_bounds = array<i64: 1, 8, 2, 1>}]} {
    %c0_i32 = arith.constant 0 : i32
    %0 = arith.cmpi eq, %arg0, %c0_i32 : i32
    %1 = arith.extui %0 : i1 to i32
    %c0_i32_0 = arith.constant 0 : i32
    %2 = arith.cmpi ne, %1, %c0_i32_0 : i32
    scf.if %2 {
      %cst_96 = arith.constant 0.000000e+00 : f32
      %218 = vector.broadcast %cst_96 : f32 to vector<8x2x32xf32>
      %c0_97 = arith.constant 0 : index
      %c0_98 = arith.constant 0 : index
      %c0_99 = arith.constant 0 : index
      %219 = vector.load %arg21[%c0_97, %c0_98, %c0_99] : memref<8x2x32xf32, #tpu.memory_space<vmem>>, vector<8x2x32xf32>
      tpu.vector_store %arg21[%c0_97, %c0_98, %c0_99], %218 {strides = array<i32>} : memref<8x2x32xf32, #tpu.memory_space<vmem>>, vector<8x2x32xf32>,
      %cst_100 = arith.constant 0.000000e+00 : f32
      %220 = vector.broadcast %cst_100 : f32 to vector<4x32xf32>
      %c0_101 = arith.constant 0 : index
      %c0_102 = arith.constant 0 : index
      %221 = vector.load %arg22[%c0_101, %c0_102] : memref<4x32xf32, #tpu.memory_space<vmem>>, vector<4x32xf32>
      tpu.vector_store %arg22[%c0_101, %c0_102], %220 {strides = array<i32>} : memref<4x32xf32, #tpu.memory_space<vmem>>, vector<4x32xf32>,
      %cst_103 = arith.constant 0.000000e+00 : f32
      %222 = vector.broadcast %cst_103 : f32 to vector<2x32xf32>
      %c0_104 = arith.constant 0 : index
      %c0_105 = arith.constant 0 : index
      %223 = vector.load %arg23[%c0_104, %c0_105] : memref<2x32xf32, #tpu.memory_space<vmem>>, vector<2x32xf32>
      tpu.vector_store %arg23[%c0_104, %c0_105], %222 {strides = array<i32>} : memref<2x32xf32, #tpu.memory_space<vmem>>, vector<2x32xf32>,
    } else {
    }
    %c0 = arith.constant 0 : index
    %c0_1 = arith.constant 0 : index
    %c0_2 = arith.constant 0 : index
    %3 = vector.load %arg1[%c0, %c0_1, %c0_2] : memref<1x2x32xf32, #tpu.memory_space<vmem>>, vector<1x2x32xf32>
    %4 = vector.shape_cast %3 : vector<1x2x32xf32> to vector<2x32xf32>
    %c0_3 = arith.constant 0 : index
    %c0_4 = arith.constant 0 : index
    %c0_5 = arith.constant 0 : index
    %5 = vector.load %arg2[%c0_3, %c0_4, %c0_5] : memref<1x2x2xf32, #tpu.memory_space<vmem>>, vector<1x2x2xf32>
    %6 = vector.shape_cast %5 : vector<1x2x2xf32> to vector<2x2xf32>
    %c0_6 = arith.constant 0 : index
    %c0_7 = arith.constant 0 : index
    %c0_8 = arith.constant 0 : index
    %7 = vector.load %arg3[%c0_6, %c0_7, %c0_8] : memref<1x4x1xf32, #tpu.memory_space<vmem>>, vector<1x4x1xf32>
    %8 = vector.shape_cast %7 : vector<1x4x1xf32> to vector<4x1xf32>
    %c0_9 = arith.constant 0 : index
    %c0_10 = arith.constant 0 : index
    %9 = vector.load %arg22[%c0_9, %c0_10] : memref<4x32xf32, #tpu.memory_space<vmem>>, vector<4x32xf32>
    %10 = tpu.iota {dimensions = array<i32: 1>} : vector<2x2xi32>
    %11 = arith.sitofp %10 : vector<2x2xi32> to vector<2x2xf32>
    %cst = arith.constant dense<0xFF800000> : vector<2xf32>
    %12 = vector.multi_reduction <maximumf>, %6, %cst [1] : vector<2x2xf32> to vector<2xf32>
    %13 = vector.shape_cast %12 : vector<2xf32> to vector<2x1xf32>
    %14 = vector.broadcast %13 : vector<2x1xf32> to vector<2x2xf32>
    %15 = arith.cmpf oeq, %6, %14 : vector<2x2xf32>
    %cst_11 = arith.constant 2.000000e+00 : f32
    %16 = vector.broadcast %cst_11 : f32 to vector<2x2xf32>
    %17 = arith.select %15, %11, %16 : vector<2x2xi1>, vector<2x2xf32>
    %cst_12 = arith.constant dense<0x7F800000> : vector<2xf32>
    %18 = vector.multi_reduction <minimumf>, %17, %cst_12 [1] : vector<2x2xf32> to vector<2xf32>
    %19 = vector.shape_cast %18 : vector<2xf32> to vector<2x1xf32>
    %20 = tpu.iota {dimensions = array<i32: 1>} : vector<2x4xi32>
    %21 = arith.sitofp %20 : vector<2x4xi32> to vector<2x4xf32>
    %22 = tpu.iota {dimensions = array<i32: 0>} : vector<2x4xi32>
    %23 = arith.sitofp %22 : vector<2x4xi32> to vector<2x4xf32>
    %cst_13 = arith.constant 2.000000e+00 : f32
    %24 = vector.broadcast %cst_13 : f32 to vector<2x4xf32>
    %25 = arith.mulf %23, %24 : vector<2x4xf32>
    %26 = vector.broadcast %19 : vector<2x1xf32> to vector<2x4xf32>
    %27 = arith.addf %25, %26 : vector<2x4xf32>
    %28 = arith.cmpf oeq, %21, %27 : vector<2x4xf32>
    %29 = arith.extui %28 : vector<2x4xi1> to vector<2x4xi32>
    %30 = arith.sitofp %29 : vector<2x4xi32> to vector<2x4xf32>
    %31 = tpu.iota {dimensions = array<i32: 0>} : vector<4x2xi32>
    %32 = arith.sitofp %31 : vector<4x2xi32> to vector<4x2xf32>
    %33 = tpu.iota {dimensions = array<i32: 1>} : vector<4x2xi32>
    %34 = arith.sitofp %33 : vector<4x2xi32> to vector<4x2xf32>
    %cst_14 = arith.constant 2.000000e+00 : f32
    %35 = vector.broadcast %cst_14 : f32 to vector<4x2xf32>
    %36 = arith.mulf %34, %35 : vector<4x2xf32>
    %37 = arith.cmpf oge, %32, %36 : vector<4x2xf32>
    %cst_15 = arith.constant 1.000000e+00 : f32
    %38 = vector.broadcast %cst_15 : f32 to vector<4x2xf32>
    %39 = arith.addf %34, %38 : vector<4x2xf32>
    %cst_16 = arith.constant 2.000000e+00 : f32
    %40 = vector.broadcast %cst_16 : f32 to vector<4x2xf32>
    %41 = arith.mulf %39, %40 : vector<4x2xf32>
    %42 = arith.cmpf olt, %32, %41 : vector<4x2xf32>
    %43 = arith.andi %37, %42 : vector<4x2xi1>
    %44 = arith.extui %43 : vector<4x2xi1> to vector<4x2xi32>
    %45 = arith.sitofp %44 : vector<4x2xi32> to vector<4x2xf32>
    %cst_17 = arith.constant dense<0.000000e+00> : vector<2x32xf32>
    %46 = tpu.matmul %30, %9, %cst_17 {dimension_numbers = #tpu.dot_dimension_numbers<[1], [0], [0], [1], [0, 0, 1, 1], [], []>} : vector<2x4xf32>, vector<4x32xf32>, vector<2x32xf32> -> vector<2x32xf32>
    %c1_i32 = arith.constant 1 : i32
    %47 = arith.subi %arg0, %c1_i32 : i32
    %c0_i32_18 = arith.constant 0 : i32
    %48 = arith.maxsi %47, %c0_i32_18 : i32
    %49 = arith.index_cast %48 : i32 to index
    %c0_19 = arith.constant 0 : index
    %c0_20 = arith.constant 0 : index
    %50 = vector.load %arg21[%49, %c0_19, %c0_20] : memref<8x2x32xf32, #tpu.memory_space<vmem>>, vector<1x2x32xf32>
    %51 = vector.shape_cast %50 : vector<1x2x32xf32> to vector<2x32xf32>
    %c0_21 = arith.constant 0 : index
    %c0_22 = arith.constant 0 : index
    %52 = vector.load %arg4[%c0_21, %c0_22] : memref<32x96xf32, #tpu.memory_space<vmem>>, vector<32x96xf32>
    %cst_23 = arith.constant dense<0.000000e+00> : vector<2x96xf32>
    %53 = tpu.matmul %4, %52, %cst_23 {dimension_numbers = #tpu.dot_dimension_numbers<[1], [0], [0], [1], [0, 0, 1, 1], [], []>} : vector<2x32xf32>, vector<32x96xf32>, vector<2x96xf32> -> vector<2x96xf32>
    %c0_24 = arith.constant 0 : index
    %c0_25 = arith.constant 0 : index
    %54 = vector.load %arg5[%c0_24, %c0_25] : memref<32x96xf32, #tpu.memory_space<vmem>>, vector<32x96xf32>
    %cst_26 = arith.constant dense<0.000000e+00> : vector<2x96xf32>
    %55 = tpu.matmul %46, %54, %cst_26 {dimension_numbers = #tpu.dot_dimension_numbers<[1], [0], [0], [1], [0, 0, 1, 1], [], []>} : vector<2x32xf32>, vector<32x96xf32>, vector<2x96xf32> -> vector<2x96xf32>
    %56 = arith.addf %53, %55 : vector<2x96xf32>
    %c0_27 = arith.constant 0 : index
    %c0_28 = arith.constant 0 : index
    %57 = vector.load %arg7[%c0_27, %c0_28] : memref<1x96xf32, #tpu.memory_space<vmem>>, vector<1x96xf32>
    %58 = vector.broadcast %57 : vector<1x96xf32> to vector<2x96xf32>
    %59 = arith.addf %56, %58 : vector<2x96xf32>
    %c0_29 = arith.constant 0 : index
    %c0_30 = arith.constant 0 : index
    %60 = vector.load %arg6[%c0_29, %c0_30] : memref<32x96xf32, #tpu.memory_space<vmem>>, vector<32x96xf32>
    %cst_31 = arith.constant dense<0.000000e+00> : vector<2x96xf32>
    %61 = tpu.matmul %51, %60, %cst_31 {dimension_numbers = #tpu.dot_dimension_numbers<[1], [0], [0], [1], [0, 0, 1, 1], [], []>} : vector<2x32xf32>, vector<32x96xf32>, vector<2x96xf32> -> vector<2x96xf32>
    %c0_32 = arith.constant 0 : index
    %c0_33 = arith.constant 0 : index
    %62 = vector.load %arg8[%c0_32, %c0_33] : memref<1x96xf32, #tpu.memory_space<vmem>>, vector<1x96xf32>
    %63 = vector.broadcast %62 : vector<1x96xf32> to vector<2x96xf32>
    %64 = arith.addf %61, %63 : vector<2x96xf32>
    %65 = vector.extract_strided_slice %59 {offsets = [0, 0], sizes = [2, 32], strides = [1, 1]} : vector<2x96xf32> to vector<2x32xf32>
    %66 = vector.extract_strided_slice %64 {offsets = [0, 0], sizes = [2, 32], strides = [1, 1]} : vector<2x96xf32> to vector<2x32xf32>
    %67 = arith.addf %65, %66 : vector<2x32xf32>
    %68 = arith.negf %67 : vector<2x32xf32>
    %69 = math.exp %68 : vector<2x32xf32>
    %cst_34 = arith.constant 1.000000e+00 : f32
    %70 = vector.broadcast %cst_34 : f32 to vector<2x32xf32>
    %71 = arith.addf %70, %69 : vector<2x32xf32>
    %72 = arith.divf %70, %71 : vector<2x32xf32>
    %73 = vector.extract_strided_slice %59 {offsets = [0, 32], sizes = [2, 32], strides = [1, 1]} : vector<2x96xf32> to vector<2x32xf32>
    %74 = vector.extract_strided_slice %64 {offsets = [0, 32], sizes = [2, 32], strides = [1, 1]} : vector<2x96xf32> to vector<2x32xf32>
    %75 = arith.addf %73, %74 : vector<2x32xf32>
    %76 = arith.negf %75 : vector<2x32xf32>
    %77 = math.exp %76 : vector<2x32xf32>
    %cst_35 = arith.constant 1.000000e+00 : f32
    %78 = vector.broadcast %cst_35 : f32 to vector<2x32xf32>
    %79 = arith.addf %78, %77 : vector<2x32xf32>
    %80 = arith.divf %78, %79 : vector<2x32xf32>
    %81 = vector.extract_strided_slice %59 {offsets = [0, 64], sizes = [2, 32], strides = [1, 1]} : vector<2x96xf32> to vector<2x32xf32>
    %82 = vector.extract_strided_slice %64 {offsets = [0, 64], sizes = [2, 32], strides = [1, 1]} : vector<2x96xf32> to vector<2x32xf32>
    %83 = arith.mulf %72, %82 : vector<2x32xf32>
    %84 = arith.addf %81, %83 : vector<2x32xf32>
    %85 = math.tanh %84 : vector<2x32xf32>
    %cst_36 = arith.constant 1.000000e+00 : f32
    %86 = vector.broadcast %cst_36 : f32 to vector<2x32xf32>
    %87 = arith.subf %86, %80 : vector<2x32xf32>
    %88 = arith.mulf %87, %85 : vector<2x32xf32>
    %89 = arith.mulf %80, %51 : vector<2x32xf32>
    %90 = arith.addf %88, %89 : vector<2x32xf32>
    %91 = arith.index_cast %arg0 : i32 to index
    %c0_37 = arith.constant 0 : index
    %c0_38 = arith.constant 0 : index
    %92 = vector.load %arg21[%91, %c0_37, %c0_38] : memref<8x2x32xf32, #tpu.memory_space<vmem>>, vector<1x2x32xf32>
    %93 = vector.shape_cast %92 : vector<1x2x32xf32> to vector<2x32xf32>
    %94 = vector.shape_cast %90 : vector<2x32xf32> to vector<1x2x32xf32>
    tpu.vector_store %arg21[%91, %c0_37, %c0_38], %94 {strides = array<i32>} : memref<8x2x32xf32, #tpu.memory_space<vmem>>, vector<1x2x32xf32>,
    %c0_39 = arith.constant 0 : index
    %c0_40 = arith.constant 0 : index
    %c0_41 = arith.constant 0 : index
    %95 = vector.load %arg21[%c0_39, %c0_40, %c0_41] : memref<8x2x32xf32, #tpu.memory_space<vmem>>, vector<8x2x32xf32>
    %c0_42 = arith.constant 0 : index
    %c0_43 = arith.constant 0 : index
    %96 = vector.load %arg18[%c0_42, %c0_43] : memref<1x32xf32, #tpu.memory_space<vmem>>, vector<1x32xf32>
    %97 = vector.shape_cast %96 : vector<1x32xf32> to vector<1x1x32xf32>
    %98 = vector.broadcast %97 : vector<1x1x32xf32> to vector<8x2x32xf32>
    %99 = arith.mulf %95, %98 : vector<8x2x32xf32>
    %cst_44 = arith.constant dense<0.000000e+00> : vector<8x2xf32>
    %100 = vector.multi_reduction <add>, %99, %cst_44 [2] : vector<8x2x32xf32> to vector<8x2xf32>
    %101 = vector.shape_cast %100 : vector<8x2xf32> to vector<8x2x1xf32>
    %102 = tpu.iota {dimensions = array<i32: 0>} : vector<8x2x1xi32>
    %103 = vector.broadcast %arg0 : i32 to vector<8x2x1xi32>
    %104 = arith.cmpi slt, %102, %103 : vector<8x2x1xi32>
    %cst_45 = arith.constant -1.000000e+30 : f32
    %105 = vector.broadcast %cst_45 : f32 to vector<8x2x1xf32>
    %106 = arith.select %104, %101, %105 : vector<8x2x1xi1>, vector<8x2x1xf32>
    %cst_46 = arith.constant dense<0xFF800000> : vector<2x1xf32>
    %107 = vector.multi_reduction <maximumf>, %106, %cst_46 [0] : vector<8x2x1xf32> to vector<2x1xf32>
    %108 = vector.shape_cast %107 : vector<2x1xf32> to vector<1x2x1xf32>
    %109 = vector.broadcast %108 : vector<1x2x1xf32> to vector<8x2x1xf32>
    %110 = arith.subf %106, %109 : vector<8x2x1xf32>
    %111 = math.exp %110 : vector<8x2x1xf32>
    %112 = arith.extui %104 : vector<8x2x1xi1> to vector<8x2x1xi32>
    %113 = arith.sitofp %112 : vector<8x2x1xi32> to vector<8x2x1xf32>
    %114 = arith.mulf %111, %113 : vector<8x2x1xf32>
    %cst_47 = arith.constant dense<0.000000e+00> : vector<2x1xf32>
    %115 = vector.multi_reduction <add>, %114, %cst_47 [0] : vector<8x2x1xf32> to vector<2x1xf32>
    %116 = vector.shape_cast %115 : vector<2x1xf32> to vector<1x2x1xf32>
    %cst_48 = arith.constant 0.000000e+00 : f32
    %117 = vector.broadcast %cst_48 : f32 to vector<1x2x1xf32>
    %118 = arith.cmpf ogt, %116, %117 : vector<1x2x1xf32>
    %cst_49 = arith.constant 1.000000e+00 : f32
    %119 = vector.broadcast %cst_49 : f32 to vector<1x2x1xf32>
    %120 = arith.select %118, %116, %119 : vector<1x2x1xi1>, vector<1x2x1xf32>
    %121 = vector.broadcast %120 : vector<1x2x1xf32> to vector<8x2x1xf32>
    %122 = arith.divf %114, %121 : vector<8x2x1xf32>
    %123 = vector.broadcast %122 : vector<8x2x1xf32> to vector<8x2x32xf32>
    %124 = arith.mulf %123, %95 : vector<8x2x32xf32>
    %cst_50 = arith.constant dense<0.000000e+00> : vector<2x32xf32>
    %125 = vector.multi_reduction <add>, %124, %cst_50 [0] : vector<8x2x32xf32> to vector<2x32xf32>
    %126 = vector.shape_cast %122 : vector<8x2x1xf32> to vector<1x8x2x1xf32>
    %c0_51 = arith.constant 0 : index
    %c0_52 = arith.constant 0 : index
    %c0_53 = arith.constant 0 : index
    %c0_54 = arith.constant 0 : index
    %127 = vector.load %arg20[%c0_51, %c0_52, %c0_53, %c0_54] : memref<1x8x2x1xf32, #tpu.memory_space<vmem>>, vector<1x8x2x1xf32>
    tpu.vector_store %arg20[%c0_51, %c0_52, %c0_53, %c0_54], %126 {strides = array<i32>} : memref<1x8x2x1xf32, #tpu.memory_space<vmem>>, vector<1x8x2x1xf32>,
    %c0_55 = arith.constant 0 : index
    %c0_56 = arith.constant 0 : index
    %128 = vector.load %arg9[%c0_55, %c0_56] : memref<32x96xf32, #tpu.memory_space<vmem>>, vector<32x96xf32>
    %cst_57 = arith.constant dense<0.000000e+00> : vector<2x96xf32>
    %129 = tpu.matmul %4, %128, %cst_57 {dimension_numbers = #tpu.dot_dimension_numbers<[1], [0], [0], [1], [0, 0, 1, 1], [], []>} : vector<2x32xf32>, vector<32x96xf32>, vector<2x96xf32> -> vector<2x96xf32>
    %c0_58 = arith.constant 0 : index
    %c0_59 = arith.constant 0 : index
    %130 = vector.load %arg10[%c0_58, %c0_59] : memref<32x96xf32, #tpu.memory_space<vmem>>, vector<32x96xf32>
    %cst_60 = arith.constant dense<0.000000e+00> : vector<2x96xf32>
    %131 = tpu.matmul %125, %130, %cst_60 {dimension_numbers = #tpu.dot_dimension_numbers<[1], [0], [0], [1], [0, 0, 1, 1], [], []>} : vector<2x32xf32>, vector<32x96xf32>, vector<2x96xf32> -> vector<2x96xf32>
    %132 = arith.addf %129, %131 : vector<2x96xf32>
    %c0_61 = arith.constant 0 : index
    %c0_62 = arith.constant 0 : index
    %133 = vector.load %arg12[%c0_61, %c0_62] : memref<1x96xf32, #tpu.memory_space<vmem>>, vector<1x96xf32>
    %134 = vector.broadcast %133 : vector<1x96xf32> to vector<2x96xf32>
    %135 = arith.addf %132, %134 : vector<2x96xf32>
    %cst_63 = arith.constant dense<0.000000e+00> : vector<4x96xf32>
    %136 = tpu.matmul %45, %135, %cst_63 {dimension_numbers = #tpu.dot_dimension_numbers<[1], [0], [0], [1], [0, 0, 1, 1], [], []>} : vector<4x2xf32>, vector<2x96xf32>, vector<4x96xf32> -> vector<4x96xf32>
    %c0_64 = arith.constant 0 : index
    %c0_65 = arith.constant 0 : index
    %137 = vector.load %arg11[%c0_64, %c0_65] : memref<32x96xf32, #tpu.memory_space<vmem>>, vector<32x96xf32>
    %cst_66 = arith.constant dense<0.000000e+00> : vector<4x96xf32>
    %138 = tpu.matmul %9, %137, %cst_66 {dimension_numbers = #tpu.dot_dimension_numbers<[1], [0], [0], [1], [0, 0, 1, 1], [], []>} : vector<4x32xf32>, vector<32x96xf32>, vector<4x96xf32> -> vector<4x96xf32>
    %c0_67 = arith.constant 0 : index
    %c0_68 = arith.constant 0 : index
    %139 = vector.load %arg13[%c0_67, %c0_68] : memref<1x96xf32, #tpu.memory_space<vmem>>, vector<1x96xf32>
    %140 = vector.broadcast %139 : vector<1x96xf32> to vector<4x96xf32>
    %141 = arith.addf %138, %140 : vector<4x96xf32>
    %142 = vector.extract_strided_slice %136 {offsets = [0, 0], sizes = [4, 32], strides = [1, 1]} : vector<4x96xf32> to vector<4x32xf32>
    %143 = vector.extract_strided_slice %141 {offsets = [0, 0], sizes = [4, 32], strides = [1, 1]} : vector<4x96xf32> to vector<4x32xf32>
    %144 = arith.addf %142, %143 : vector<4x32xf32>
    %145 = arith.negf %144 : vector<4x32xf32>
    %146 = math.exp %145 : vector<4x32xf32>
    %cst_69 = arith.constant 1.000000e+00 : f32
    %147 = vector.broadcast %cst_69 : f32 to vector<4x32xf32>
    %148 = arith.addf %147, %146 : vector<4x32xf32>
    %149 = arith.divf %147, %148 : vector<4x32xf32>
    %150 = vector.extract_strided_slice %136 {offsets = [0, 32], sizes = [4, 32], strides = [1, 1]} : vector<4x96xf32> to vector<4x32xf32>
    %151 = vector.extract_strided_slice %141 {offsets = [0, 32], sizes = [4, 32], strides = [1, 1]} : vector<4x96xf32> to vector<4x32xf32>
    %152 = arith.addf %150, %151 : vector<4x32xf32>
    %153 = arith.negf %152 : vector<4x32xf32>
    %154 = math.exp %153 : vector<4x32xf32>
    %cst_70 = arith.constant 1.000000e+00 : f32
    %155 = vector.broadcast %cst_70 : f32 to vector<4x32xf32>
    %156 = arith.addf %155, %154 : vector<4x32xf32>
    %157 = arith.divf %155, %156 : vector<4x32xf32>
    %158 = vector.extract_strided_slice %136 {offsets = [0, 64], sizes = [4, 32], strides = [1, 1]} : vector<4x96xf32> to vector<4x32xf32>
    %159 = vector.extract_strided_slice %141 {offsets = [0, 64], sizes = [4, 32], strides = [1, 1]} : vector<4x96xf32> to vector<4x32xf32>
    %160 = arith.mulf %149, %159 : vector<4x32xf32>
    %161 = arith.addf %158, %160 : vector<4x32xf32>
    %162 = math.tanh %161 : vector<4x32xf32>
    %cst_71 = arith.constant 1.000000e+00 : f32
    %163 = vector.broadcast %cst_71 : f32 to vector<4x32xf32>
    %164 = arith.subf %163, %157 : vector<4x32xf32>
    %165 = arith.mulf %164, %162 : vector<4x32xf32>
    %166 = arith.mulf %157, %9 : vector<4x32xf32>
    %167 = arith.addf %165, %166 : vector<4x32xf32>
    %cst_72 = arith.constant 1.000000e+00 : f32
    %168 = vector.broadcast %cst_72 : f32 to vector<4x1xf32>
    %169 = arith.subf %168, %8 : vector<4x1xf32>
    %170 = vector.broadcast %169 : vector<4x1xf32> to vector<4x32xf32>
    %171 = arith.mulf %9, %170 : vector<4x32xf32>
    %172 = vector.broadcast %8 : vector<4x1xf32> to vector<4x32xf32>
    %173 = arith.mulf %167, %172 : vector<4x32xf32>
    %174 = arith.addf %171, %173 : vector<4x32xf32>
    %c0_73 = arith.constant 0 : index
    %c0_74 = arith.constant 0 : index
    %175 = vector.load %arg22[%c0_73, %c0_74] : memref<4x32xf32, #tpu.memory_space<vmem>>, vector<4x32xf32>
    tpu.vector_store %arg22[%c0_73, %c0_74], %174 {strides = array<i32>} : memref<4x32xf32, #tpu.memory_space<vmem>>, vector<4x32xf32>,
    %c0_75 = arith.constant 0 : index
    %c0_76 = arith.constant 0 : index
    %176 = vector.load %arg23[%c0_75, %c0_76] : memref<2x32xf32, #tpu.memory_space<vmem>>, vector<2x32xf32>
    %cst_77 = arith.constant dense<0.000000e+00> : vector<2x32xf32>
    %177 = tpu.matmul %30, %174, %cst_77 {dimension_numbers = #tpu.dot_dimension_numbers<[1], [0], [0], [1], [0, 0, 1, 1], [], []>} : vector<2x4xf32>, vector<4x32xf32>, vector<2x32xf32> -> vector<2x32xf32>
    %c0_78 = arith.constant 0 : index
    %c0_79 = arith.constant 0 : index
    %178 = vector.load %arg14[%c0_78, %c0_79] : memref<32x96xf32, #tpu.memory_space<vmem>>, vector<32x96xf32>
    %cst_80 = arith.constant dense<0.000000e+00> : vector<2x96xf32>
    %179 = tpu.matmul %177, %178, %cst_80 {dimension_numbers = #tpu.dot_dimension_numbers<[1], [0], [0], [1], [0, 0, 1, 1], [], []>} : vector<2x32xf32>, vector<32x96xf32>, vector<2x96xf32> -> vector<2x96xf32>
    %c0_81 = arith.constant 0 : index
    %c0_82 = arith.constant 0 : index
    %180 = vector.load %arg16[%c0_81, %c0_82] : memref<1x96xf32, #tpu.memory_space<vmem>>, vector<1x96xf32>
    %181 = vector.broadcast %180 : vector<1x96xf32> to vector<2x96xf32>
    %182 = arith.addf %179, %181 : vector<2x96xf32>
    %c0_83 = arith.constant 0 : index
    %c0_84 = arith.constant 0 : index
    %183 = vector.load %arg15[%c0_83, %c0_84] : memref<32x96xf32, #tpu.memory_space<vmem>>, vector<32x96xf32>
    %cst_85 = arith.constant dense<0.000000e+00> : vector<2x96xf32>
    %184 = tpu.matmul %176, %183, %cst_85 {dimension_numbers = #tpu.dot_dimension_numbers<[1], [0], [0], [1], [0, 0, 1, 1], [], []>} : vector<2x32xf32>, vector<32x96xf32>, vector<2x96xf32> -> vector<2x96xf32>
    %c0_86 = arith.constant 0 : index
    %c0_87 = arith.constant 0 : index
    %185 = vector.load %arg17[%c0_86, %c0_87] : memref<1x96xf32, #tpu.memory_space<vmem>>, vector<1x96xf32>
    %186 = vector.broadcast %185 : vector<1x96xf32> to vector<2x96xf32>
    %187 = arith.addf %184, %186 : vector<2x96xf32>
    %188 = vector.extract_strided_slice %182 {offsets = [0, 0], sizes = [2, 32], strides = [1, 1]} : vector<2x96xf32> to vector<2x32xf32>
    %189 = vector.extract_strided_slice %187 {offsets = [0, 0], sizes = [2, 32], strides = [1, 1]} : vector<2x96xf32> to vector<2x32xf32>
    %190 = arith.addf %188, %189 : vector<2x32xf32>
    %191 = arith.negf %190 : vector<2x32xf32>
    %192 = math.exp %191 : vector<2x32xf32>
    %cst_88 = arith.constant 1.000000e+00 : f32
    %193 = vector.broadcast %cst_88 : f32 to vector<2x32xf32>
    %194 = arith.addf %193, %192 : vector<2x32xf32>
    %195 = arith.divf %193, %194 : vector<2x32xf32>
    %196 = vector.extract_strided_slice %182 {offsets = [0, 32], sizes = [2, 32], strides = [1, 1]} : vector<2x96xf32> to vector<2x32xf32>
    %197 = vector.extract_strided_slice %187 {offsets = [0, 32], sizes = [2, 32], strides = [1, 1]} : vector<2x96xf32> to vector<2x32xf32>
    %198 = arith.addf %196, %197 : vector<2x32xf32>
    %199 = arith.negf %198 : vector<2x32xf32>
    %200 = math.exp %199 : vector<2x32xf32>
    %cst_89 = arith.constant 1.000000e+00 : f32
    %201 = vector.broadcast %cst_89 : f32 to vector<2x32xf32>
    %202 = arith.addf %201, %200 : vector<2x32xf32>
    %203 = arith.divf %201, %202 : vector<2x32xf32>
    %204 = vector.extract_strided_slice %182 {offsets = [0, 64], sizes = [2, 32], strides = [1, 1]} : vector<2x96xf32> to vector<2x32xf32>
    %205 = vector.extract_strided_slice %187 {offsets = [0, 64], sizes = [2, 32], strides = [1, 1]} : vector<2x96xf32> to vector<2x32xf32>
    %206 = arith.mulf %195, %205 : vector<2x32xf32>
    %207 = arith.addf %204, %206 : vector<2x32xf32>
    %208 = math.tanh %207 : vector<2x32xf32>
    %cst_90 = arith.constant 1.000000e+00 : f32
    %209 = vector.broadcast %cst_90 : f32 to vector<2x32xf32>
    %210 = arith.subf %209, %203 : vector<2x32xf32>
    %211 = arith.mulf %210, %208 : vector<2x32xf32>
    %212 = arith.mulf %203, %176 : vector<2x32xf32>
    %213 = arith.addf %211, %212 : vector<2x32xf32>
    %c0_91 = arith.constant 0 : index
    %c0_92 = arith.constant 0 : index
    %214 = vector.load %arg23[%c0_91, %c0_92] : memref<2x32xf32, #tpu.memory_space<vmem>>, vector<2x32xf32>
    tpu.vector_store %arg23[%c0_91, %c0_92], %213 {strides = array<i32>} : memref<2x32xf32, #tpu.memory_space<vmem>>, vector<2x32xf32>,
    %c0_93 = arith.constant 0 : index
    %c0_94 = arith.constant 0 : index
    %c0_95 = arith.constant 0 : index
    %215 = vector.load %arg19[%c0_93, %c0_94, %c0_95] : memref<1x2x32xf32, #tpu.memory_space<vmem>>, vector<1x2x32xf32>
    %216 = vector.shape_cast %215 : vector<1x2x32xf32> to vector<2x32xf32>
    %217 = vector.shape_cast %213 : vector<2x32xf32> to vector<1x2x32xf32>
    tpu.vector_store %arg19[%c0_93, %c0_94, %c0_95], %217 {strides = array<i32>} : memref<1x2x32xf32, #tpu.memory_space<vmem>>, vector<1x2x32xf32>,
    return
  }
  func.func @transform_0(%arg0: i32) -> (i32, i32, i32) {
    %c0_i32 = arith.constant 0 : i32
    %c0_i32_0 = arith.constant 0 : i32
    %c0_i32_1 = arith.constant 0 : i32
    return %arg0, %c0_i32, %c0_i32_0 : i32, i32, i32
  }
  func.func @transform_1(%arg0: i32) -> (i32, i32, i32) {
    %c0_i32 = arith.constant 0 : i32
    %c0_i32_0 = arith.constant 0 : i32
    %c0_i32_1 = arith.constant 0 : i32
    return %arg0, %c0_i32, %c0_i32_0 : i32, i32, i32
  }
  func.func @transform_2(%arg0: i32) -> (i32, i32, i32) {
    %c0_i32 = arith.constant 0 : i32
    %c0_i32_0 = arith.constant 0 : i32
    %c0_i32_1 = arith.constant 0 : i32
    return %arg0, %c0_i32, %c0_i32_0 : i32, i32, i32
  }
  func.func @transform_3(%arg0: i32) -> (i32, i32) {
    %c0_i32 = arith.constant 0 : i32
    %c0_i32_0 = arith.constant 0 : i32
    %c0_i32_1 = arith.constant 0 : i32
    return %c0_i32, %c0_i32_0 : i32, i32
  }
  func.func @transform_4(%arg0: i32) -> (i32, i32) {
    %c0_i32 = arith.constant 0 : i32
    %c0_i32_0 = arith.constant 0 : i32
    %c0_i32_1 = arith.constant 0 : i32
    return %c0_i32, %c0_i32_0 : i32, i32
  }
  func.func @transform_5(%arg0: i32) -> (i32, i32) {
    %c0_i32 = arith.constant 0 : i32
    %c0_i32_0 = arith.constant 0 : i32
    %c0_i32_1 = arith.constant 0 : i32
    return %c0_i32, %c0_i32_0 : i32, i32
  }
  func.func @transform_6(%arg0: i32) -> (i32, i32) {
    %c0_i32 = arith.constant 0 : i32
    %c0_i32_0 = arith.constant 0 : i32
    %c0_i32_1 = arith.constant 0 : i32
    return %c0_i32, %c0_i32_0 : i32, i32
  }
  func.func @transform_7(%arg0: i32) -> (i32, i32) {
    %c0_i32 = arith.constant 0 : i32
    %c0_i32_0 = arith.constant 0 : i32
    %c0_i32_1 = arith.constant 0 : i32
    return %c0_i32, %c0_i32_0 : i32, i32
  }
  func.func @transform_8(%arg0: i32) -> (i32, i32) {
    %c0_i32 = arith.constant 0 : i32
    %c0_i32_0 = arith.constant 0 : i32
    %c0_i32_1 = arith.constant 0 : i32
    return %c0_i32, %c0_i32_0 : i32, i32
  }
  func.func @transform_9(%arg0: i32) -> (i32, i32) {
    %c0_i32 = arith.constant 0 : i32
    %c0_i32_0 = arith.constant 0 : i32
    %c0_i32_1 = arith.constant 0 : i32
    return %c0_i32, %c0_i32_0 : i32, i32
  }
  func.func @transform_10(%arg0: i32) -> (i32, i32) {
    %c0_i32 = arith.constant 0 : i32
    %c0_i32_0 = arith.constant 0 : i32
    %c0_i32_1 = arith.constant 0 : i32
    return %c0_i32, %c0_i32_0 : i32, i32
  }
  func.func @transform_11(%arg0: i32) -> (i32, i32) {
    %c0_i32 = arith.constant 0 : i32
    %c0_i32_0 = arith.constant 0 : i32
    %c0_i32_1 = arith.constant 0 : i32
    return %c0_i32, %c0_i32_0 : i32, i32
  }
  func.func @transform_12(%arg0: i32) -> (i32, i32) {
    %c0_i32 = arith.constant 0 : i32
    %c0_i32_0 = arith.constant 0 : i32
    %c0_i32_1 = arith.constant 0 : i32
    return %c0_i32, %c0_i32_0 : i32, i32
  }
  func.func @transform_13(%arg0: i32) -> (i32, i32) {
    %c0_i32 = arith.constant 0 : i32
    %c0_i32_0 = arith.constant 0 : i32
    %c0_i32_1 = arith.constant 0 : i32
    return %c0_i32, %c0_i32_0 : i32, i32
  }
  func.func @transform_14(%arg0: i32) -> (i32, i32) {
    %c0_i32 = arith.constant 0 : i32
    %c0_i32_0 = arith.constant 0 : i32
    %c0_i32_1 = arith.constant 0 : i32
    return %c0_i32, %c0_i32_0 : i32, i32
  }
  func.func @transform_15(%arg0: i32) -> (i32, i32) {
    %c0_i32 = arith.constant 0 : i32
    %c0_i32_0 = arith.constant 0 : i32
    %c0_i32_1 = arith.constant 0 : i32
    return %c0_i32, %c0_i32_0 : i32, i32
  }
  func.func @transform_16(%arg0: i32) -> (i32, i32) {
    %c0_i32 = arith.constant 0 : i32
    %c0_i32_0 = arith.constant 0 : i32
    %c0_i32_1 = arith.constant 0 : i32
    return %c0_i32, %c0_i32_0 : i32, i32
  }
  func.func @transform_17(%arg0: i32) -> (i32, i32) {
    %c0_i32 = arith.constant 0 : i32
    %c0_i32_0 = arith.constant 0 : i32
    %c0_i32_1 = arith.constant 0 : i32
    return %c0_i32, %c0_i32_0 : i32, i32
  }
  func.func @transform_18(%arg0: i32) -> (i32, i32, i32) {
    %c0_i32 = arith.constant 0 : i32
    %c0_i32_0 = arith.constant 0 : i32
    %c0_i32_1 = arith.constant 0 : i32
    return %arg0, %c0_i32, %c0_i32_0 : i32, i32, i32
  }
  func.func @transform_19(%arg0: i32) -> (i32, i32, i32, i32) {
    %c0_i32 = arith.constant 0 : i32
    %c0_i32_0 = arith.constant 0 : i32
    %c0_i32_1 = arith.constant 0 : i32
    %c0_i32_2 = arith.constant 0 : i32
    return %arg0, %c0_i32, %c0_i32_0, %c0_i32_1 : i32, i32, i32, i32
  }
}

</mosaic_0001>

<llo_original>
// kernel: dialogue_rnn_forward.1
$region0: #{dialogue_rnn_forward.1}
  #allocation0 [shape = 'u32[]', space=smem, size = 0x4, offset = 0x4, fixed_abs, tag = 'smem constant byte address 0x4 - core index']
  #allocation1 [shape = 'u32[144,128]{1,0:T(1,128)}', space=vmem, size = 0x12000, scoped, tag = 'internal scratch']
  #allocation2 [shape = 'f32[8,2,32]{2,1,0:T(2,128)}', space=vmem, size = 0x2000, scoped, tag = 'scratch operand']
  #allocation3 [shape = 'f32[4,32]{1,0:T(4,128)}', space=vmem, size = 0x800, scoped, tag = 'scratch operand']
  #allocation4 [shape = 'f32[2,32]{1,0:T(2,128)}', space=vmem, size = 0x400, scoped, tag = 'scratch operand']
  %s0 = inlined_call_operand.hbm [shape: f32[8,2,32], index: 0, kind: input, shape index: {}]
  %s1 = inlined_call_operand.vmem [shape: f32[8,2,2], index: 1, kind: input, shape index: {}]
  %s2 = inlined_call_operand.vmem [shape: f32[8,4,1], index: 2, kind: input, shape index: {}]
  %s3 = inlined_call_operand.vmem [shape: f32[32,96], index: 3, kind: input, shape index: {}]
  %s4 = inlined_call_operand.vmem [shape: f32[32,96], index: 4, kind: input, shape index: {}]
  %s5 = inlined_call_operand.hbm [shape: f32[32,96], index: 5, kind: input, shape index: {}]
  %s6 = inlined_call_operand.vmem [shape: f32[1,96], index: 6, kind: input, shape index: {}]
  %s7 = inlined_call_operand.hbm [shape: f32[1,96], index: 7, kind: input, shape index: {}]
  %s8 = inlined_call_operand.vmem [shape: f32[32,96], index: 8, kind: input, shape index: {}]
  %s9 = inlined_call_operand.hbm [shape: f32[32,96], index: 9, kind: input, shape index: {}]
  %s10 = inlined_call_operand.hbm [shape: f32[32,96], index: 10, kind: input, shape index: {}]
  %s11 = inlined_call_operand.hbm [shape: f32[1,96], index: 11, kind: input, shape index: {}]
  %s12 = inlined_call_operand.hbm [shape: f32[1,96], index: 12, kind: input, shape index: {}]
  %s13 = inlined_call_operand.hbm [shape: f32[32,96], index: 13, kind: input, shape index: {}]
  %s14 = inlined_call_operand.hbm [shape: f32[32,96], index: 14, kind: input, shape index: {}]
  %s15 = inlined_call_operand.hbm [shape: f32[1,96], index: 15, kind: input, shape index: {}]
  %s16 = inlined_call_operand.hbm [shape: f32[1,96], index: 16, kind: input, shape index: {}]
  %s17 = inlined_call_operand.hbm [shape: f32[1,32], index: 17, kind: input, shape index: {}]
  %s18 = inlined_call_operand.hbm [shape: f32[8,2,32], index: 18, kind: output, shape index: {0}]
  %s19 = inlined_call_operand.vmem [shape: f32[8,8,2,1], index: 19, kind: output, shape index: {1}]
  %20 = xla_tuple %s18, %s19
  %s21 = sld [smem:[#allocation0]]
  $region165: #{dialogue_rnn_forward.1} parent=0
    _
  %s23 = ssub.s32 1, %s21
  %s24 = scalar_select 0, %s23, %s21
  $region1: #{dialogue_rnn_forward.1} parent=0
    #allocation5 [shape = 'u8[2048]{0}', space=vmem, size = 0x800, scoped, tag = 'input window, operand 0']
    #allocation6 [shape = 's32[2]{0}', space=sflag, size = 0x8, scoped, tag = 'scoped memory for dialogue_rnn_forward.1']
    #allocation7 [shape = 's32[2]{0}', space=sflag, size = 0x8, scoped, tag = 'scoped memory for dialogue_rnn_forward.1']
    #allocation8 [shape = 'u8[16384]{0}', space=vmem, size = 0x4000, scoped, tag = 'input window, operand 5, single buffered']
    #allocation9 [shape = 's32[1]{0}', space=sflag, size = 0x4, scoped, tag = 'scoped memory for dialogue_rnn_forward.1']
    #allocation10 [shape = 'u8[512]{0}', space=vmem, size = 0x400, scoped, tag = 'input window, operand 7, single buffered']
    #allocation11 [shape = 'u8[16384]{0}', space=vmem, size = 0x4000, scoped, tag = 'input window, operand 9, single buffered']
    #allocation12 [shape = 's32[1]{0}', space=sflag, size = 0x4, scoped, tag = 'scoped memory for dialogue_rnn_forward.1']
    #allocation13 [shape = 'u8[16384]{0}', space=vmem, size = 0x4000, scoped, tag = 'input window, operand 10, single buffered']
    #allocation14 [shape = 'u8[512]{0}', space=vmem, size = 0x400, scoped, tag = 'input window, operand 11, single buffered']
    #allocation15 [shape = 's32[1]{0}', space=sflag, size = 0x4, scoped, tag = 'scoped memory for dialogue_rnn_forward.1']
    #allocation16 [shape = 'u8[512]{0}', space=vmem, size = 0x400, scoped, tag = 'input window, operand 12, single buffered']
    #allocation17 [shape = 'u8[16384]{0}', space=vmem, size = 0x4000, scoped, tag = 'input window, operand 13, single buffered']
    #allocation18 [shape = 's32[1]{0}', space=sflag, size = 0x4, scoped, tag = 'scoped memory for dialogue_rnn_forward.1']
    #allocation19 [shape = 'u8[16384]{0}', space=vmem, size = 0x4000, scoped, tag = 'input window, operand 14, single buffered']
    #allocation20 [shape = 'u8[512]{0}', space=vmem, size = 0x400, scoped, tag = 'input window, operand 15, single buffered']
    #allocation21 [shape = 's32[1]{0}', space=sflag, size = 0x4, scoped, tag = 'scoped memory for dialogue_rnn_forward.1']
    #allocation22 [shape = 'u8[512]{0}', space=vmem, size = 0x400, scoped, tag = 'input window, operand 16, single buffered']
    #allocation23 [shape = 'u8[512]{0}', space=vmem, size = 0x400, scoped, tag = 'input window, operand 17, single buffered']
    #allocation24 [shape = 's32[1]{0}', space=sflag, size = 0x4, scoped, tag = 'scoped memory for dialogue_rnn_forward.1']
    #allocation25 [shape = 'u8[2048]{0}', space=vmem, size = 0x800, scoped, tag = 'output window, operand 0']
    %25 = vsyncpa [#allocation6], 0
    %s26 = scalar_lea.sflag [#allocation6], 1
    %27 = vsyncpa %s26, 0
    %28 = vsyncpa [#allocation9], 0
    %29 = vsyncpa [#allocation12], 0
    %30 = vsyncpa [#allocation15], 0
    %31 = vsyncpa [#allocation18], 0
    %32 = vsyncpa [#allocation21], 0
    %33 = vsyncpa [#allocation24], 0
    %34 = vsyncpa [#allocation7], 0
    %s35 = scalar_lea.sflag [#allocation7], 1
    %36 = vsyncpa %s35, 0
    loop: start=0, step=1, limit=10
    $region2: #{dialogue_rnn_forward.1} parent=1 // loop_pre_header
      _
    $region3: #{dialogue_rnn_forward.1} parent=1 // loop_header
      %s38 = sphi 0, %s42
      %p39 = scmp.ge.s32.totalorder %s38, 10
      %s48 = sphi 0, %s50
      %s51 = sphi 0, %s48
      %s52 = sphi 0, %s51
      %s68 = sphi 0, %s52
      %s74 = sphi 0, %s76
      %s77 = sphi 0, %s74
      %s78 = sphi 0, %s77
      %s94 = sphi 0, %s78
      %s100 = sphi 0, %s102
      %s103 = sphi 0, %s100
      %s104 = sphi 0, %s103
      %s120 = sphi 0, %s104
      %s124 = sphi 0, %s124
      %s126 = sphi 0, %s124
      %s127 = sphi 0, %s126
      %s141 = sphi 0, %s127
      %s145 = sphi 0, %s145
      %s147 = sphi 0, %s145
      %s148 = sphi 0, %s147
      %s162 = sphi 0, %s148
      %s166 = sphi 0, %s166
      %s168 = sphi 0, %s166
      %s169 = sphi 0, %s168
      %s183 = sphi 0, %s169
      %s187 = sphi 0, %s187
      %s189 = sphi 0, %s187
      %s190 = sphi 0, %s189
      %s204 = sphi 0, %s190
      %s208 = sphi 0, %s208
      %s210 = sphi 0, %s208
      %s211 = sphi 0, %s210
      %s225 = sphi 0, %s211
      %s229 = sphi 0, %s229
      %s231 = sphi 0, %s229
      %s232 = sphi 0, %s231
      %s246 = sphi 0, %s232
      %s250 = sphi 0, %s250
      %s252 = sphi 0, %s250
      %s253 = sphi 0, %s252
      %s267 = sphi 0, %s253
      %s271 = sphi 0, %s271
      %s273 = sphi 0, %s271
      %s274 = sphi 0, %s273
      %s288 = sphi 0, %s274
      %s292 = sphi 0, %s292
      %s294 = sphi 0, %s292
      %s295 = sphi 0, %s294
      %s309 = sphi 0, %s295
      %s313 = sphi 0, %s313
      %s315 = sphi 0, %s313
      %s316 = sphi 0, %s315
      %s330 = sphi 0, %s316
      %s334 = sphi 0, %s334
      %s336 = sphi 0, %s334
      %s337 = sphi 0, %s336
      %s351 = sphi 0, %s337
      %s355 = sphi 0, %s355
      %s357 = sphi 0, %s355
      %s358 = sphi 0, %s357
      %s372 = sphi 0, %s358
      %s376 = sphi 0, %s376
      %s378 = sphi 0, %s376
      %s379 = sphi 0, %s378
      %s393 = sphi 0, %s379
      %s397 = sphi 0, %s397
      %s399 = sphi 0, %s397
      %s400 = sphi 0, %s399
      %s414 = sphi 0, %s400
      %s418 = sphi 0, %s418
      %s420 = sphi 0, %s418
      %s421 = sphi 0, %s420
      %s435 = sphi 0, %s421
      %s441 = sphi 0, %s443
      %s444 = sphi 0, %s441
      %s445 = sphi 0, %s444
      %s461 = sphi 0, %s445
      %s467 = sphi 0, %s469
      %s470 = sphi 0, %s467
      %s471 = sphi 0, %s470
      %s487 = sphi 0, %s471
    $region4: #{dialogue_rnn_forward.1} parent=1 // loop_header_branch
      %41 = sbr.rel (%p39) target = $region8
    $region5: #{dialogue_rnn_forward.1} parent=1 // loop_body
      %s43 = ssub.s32 %s38, 1
      %s44 = ssub.s32 %s38, 2
      %s45 = sadd.s32 %s38, 1
      %s46 = ssub.s32 %s38, %s45
      %p47 = scmp.eq.s32.totalorder %s46, 0
      %s49 = sadd.s32 %s48, 1
      %s50 = scalar_select %p47, %s48, %s49
      %p53 = pneg %p47
      %p54 = scmp.eq.s32.totalorder %s38, 7
      %p55 = por %p53, %p54
      %p56 = scmp.ne.s32.totalorder %s48, %s51
      %p57 = scmp.eq.s32.totalorder %s38, 0
      %p58 = por %p56, %p57
      %p59 = scmp.ne.s32.totalorder %s48, %s51
      %p60 = scmp.eq.s32.totalorder %s43, 7
      %p61 = por %p59, %p60
      %p62 = scmp.ne.s32.totalorder %s51, %s52
      %p63 = scmp.eq.s32.totalorder %s43, 0
      %p64 = por %p62, %p63
      %p65 = scmp.ne.s32.totalorder %s51, %s52
      %p66 = scmp.eq.s32.totalorder %s44, 7
      %p67 = por %p65, %p66
      %p69 = scmp.ne.s32.totalorder %s52, %s68
      %p70 = scmp.eq.s32.totalorder %s44, 0
      %p71 = por %p69, %p70
      %s72 = ssub.s32 %s38, %s45
      %p73 = scmp.eq.s32.totalorder %s72, 0
      %s75 = sadd.s32 %s74, 1
      %s76 = scalar_select %p73, %s74, %s75
      %p79 = pneg %p73
      %p80 = scmp.eq.s32.totalorder %s38, 7
      %p81 = por %p79, %p80
      %p82 = scmp.ne.s32.totalorder %s74, %s77
      %p83 = scmp.eq.s32.totalorder %s38, 0
      %p84 = por %p82, %p83
      %p85 = scmp.ne.s32.totalorder %s74, %s77
      %p86 = scmp.eq.s32.totalorder %s43, 7
      %p87 = por %p85, %p86
      %p88 = scmp.ne.s32.totalorder %s77, %s78
      %p89 = scmp.eq.s32.totalorder %s43, 0
      %p90 = por %p88, %p89
      %p91 = scmp.ne.s32.totalorder %s77, %s78
      %p92 = scmp.eq.s32.totalorder %s44, 7
      %p93 = por %p91, %p92
      %p95 = scmp.ne.s32.totalorder %s78, %s94
      %p96 = scmp.eq.s32.totalorder %s44, 0
      %p97 = por %p95, %p96
      %s98 = ssub.s32 %s38, %s45
      %p99 = scmp.eq.s32.totalorder %s98, 0
      %s101 = sadd.s32 %s100, 1
      %s102 = scalar_select %p99, %s100, %s101
      %p105 = pneg %p99
      %p106 = scmp.eq.s32.totalorder %s38, 7
      %p107 = por %p105, %p106
      %p108 = scmp.ne.s32.totalorder %s100, %s103
      %p109 = scmp.eq.s32.totalorder %s38, 0
      %p110 = por %p108, %p109
      %p111 = scmp.ne.s32.totalorder %s100, %s103
      %p112 = scmp.eq.s32.totalorder %s43, 7
      %p113 = por %p111, %p112
      %p114 = scmp.ne.s32.totalorder %s103, %s104
      %p115 = scmp.eq.s32.totalorder %s43, 0
      %p116 = por %p114, %p115
      %p117 = scmp.ne.s32.totalorder %s103, %s104
      %p118 = scmp.eq.s32.totalorder %s44, 7
      %p119 = por %p117, %p118
      %p121 = scmp.ne.s32.totalorder %s104, %s120
      %p122 = scmp.eq.s32.totalorder %s44, 0
      %p123 = por %p121, %p122
      %s125 = sadd.s32 %s124, 1
      %p128 = scmp.eq.s32.totalorder %s38, 7
      %p129 = scmp.ne.s32.totalorder %s124, %s126
      %p130 = scmp.eq.s32.totalorder %s38, 0
      %p131 = por %p129, %p130
      %p132 = scmp.ne.s32.totalorder %s124, %s126
      %p133 = scmp.eq.s32.totalorder %s43, 7
      %p134 = por %p132, %p133
      %p135 = scmp.ne.s32.totalorder %s126, %s127
      %p136 = scmp.eq.s32.totalorder %s43, 0
      %p137 = por %p135, %p136
      %p138 = scmp.ne.s32.totalorder %s126, %s127
      %p139 = scmp.eq.s32.totalorder %s44, 7
      %p140 = por %p138, %p139
      %p142 = scmp.ne.s32.totalorder %s127, %s141
      %p143 = scmp.eq.s32.totalorder %s44, 0
      %p144 = por %p142, %p143
      %s146 = sadd.s32 %s145, 1
      %p149 = scmp.eq.s32.totalorder %s38, 7
      %p150 = scmp.ne.s32.totalorder %s145, %s147
      %p151 = scmp.eq.s32.totalorder %s38, 0
      %p152 = por %p150, %p151
      %p153 = scmp.ne.s32.totalorder %s145, %s147
      %p154 = scmp.eq.s32.totalorder %s43, 7
      %p155 = por %p153, %p154
      %p156 = scmp.ne.s32.totalorder %s147, %s148
      %p157 = scmp.eq.s32.totalorder %s43, 0
      %p158 = por %p156, %p157
      %p159 = scmp.ne.s32.totalorder %s147, %s148
      %p160 = scmp.eq.s32.totalorder %s44, 7
      %p161 = por %p159, %p160
      %p163 = scmp.ne.s32.totalorder %s148, %s162
      %p164 = scmp.eq.s32.totalorder %s44, 0
      %p165 = por %p163, %p164
      %s167 = sadd.s32 %s166, 1
      %p170 = scmp.eq.s32.totalorder %s38, 7
      %p171 = scmp.ne.s32.totalorder %s166, %s168
      %p172 = scmp.eq.s32.totalorder %s38, 0
      %p173 = por %p171, %p172
      %p174 = scmp.ne.s32.totalorder %s166, %s168
      %p175 = scmp.eq.s32.totalorder %s43, 7
      %p176 = por %p174, %p175
      %p177 = scmp.ne.s32.totalorder %s168, %s169
      %p178 = scmp.eq.s32.totalorder %s43, 0
      %p179 = por %p177, %p178
      %p180 = scmp.ne.s32.totalorder %s168, %s169
      %p181 = scmp.eq.s32.totalorder %s44, 7
      %p182 = por %p180, %p181
      %p184 = scmp.ne.s32.totalorder %s169, %s183
      %p185 = scmp.eq.s32.totalorder %s44, 0
      %p186 = por %p184, %p185
      %s188 = sadd.s32 %s187, 1
      %p191 = scmp.eq.s32.totalorder %s38, 7
      %p192 = scmp.ne.s32.totalorder %s187, %s189
      %p193 = scmp.eq.s32.totalorder %s38, 0
      %p194 = por %p192, %p193
      %p195 = scmp.ne.s32.totalorder %s187, %s189
      %p196 = scmp.eq.s32.totalorder %s43, 7
      %p197 = por %p195, %p196
      %p198 = scmp.ne.s32.totalorder %s189, %s190
      %p199 = scmp.eq.s32.totalorder %s43, 0
      %p200 = por %p198, %p199
      %p201 = scmp.ne.s32.totalorder %s189, %s190
      %p202 = scmp.eq.s32.totalorder %s44, 7
      %p203 = por %p201, %p202
      %p205 = scmp.ne.s32.totalorder %s190, %s204
      %p206 = scmp.eq.s32.totalorder %s44, 0
      %p207 = por %p205, %p206
      %s209 = sadd.s32 %s208, 1
      %p212 = scmp.eq.s32.totalorder %s38, 7
      %p213 = scmp.ne.s32.totalorder %s208, %s210
      %p214 = scmp.eq.s32.totalorder %s38, 0
      %p215 = por %p213, %p214
      %p216 = scmp.ne.s32.totalorder %s208, %s210
      %p217 = scmp.eq.s32.totalorder %s43, 7
      %p218 = por %p216, %p217
      %p219 = scmp.ne.s32.totalorder %s210, %s211
      %p220 = scmp.eq.s32.totalorder %s43, 0
      %p221 = por %p219, %p220
      %p222 = scmp.ne.s32.totalorder %s210, %s211
      %p223 = scmp.eq.s32.totalorder %s44, 7
      %p224 = por %p222, %p223
      %p226 = scmp.ne.s32.totalorder %s211, %s225
      %p227 = scmp.eq.s32.totalorder %s44, 0
      %p228 = por %p226, %p227
      %s230 = sadd.s32 %s229, 1
      %p233 = scmp.eq.s32.totalorder %s38, 7
      %p234 = scmp.ne.s32.totalorder %s229, %s231
      %p235 = scmp.eq.s32.totalorder %s38, 0
      %p236 = por %p234, %p235
      %p237 = scmp.ne.s32.totalorder %s229, %s231
      %p238 = scmp.eq.s32.totalorder %s43, 7
      %p239 = por %p237, %p238
      %p240 = scmp.ne.s32.totalorder %s231, %s232
      %p241 = scmp.eq.s32.totalorder %s43, 0
      %p242 = por %p240, %p241
      %p243 = scmp.ne.s32.totalorder %s231, %s232
      %p244 = scmp.eq.s32.totalorder %s44, 7
      %p245 = por %p243, %p244
      %p247 = scmp.ne.s32.totalorder %s232, %s246
      %p248 = scmp.eq.s32.totalorder %s44, 0
      %p249 = por %p247, %p248
      %s251 = sadd.s32 %s250, 1
      %p254 = scmp.eq.s32.totalorder %s38, 7
      %p255 = scmp.ne.s32.totalorder %s250, %s252
      %p256 = scmp.eq.s32.totalorder %s38, 0
      %p257 = por %p255, %p256
      %p258 = scmp.ne.s32.totalorder %s250, %s252
      %p259 = scmp.eq.s32.totalorder %s43, 7
      %p260 = por %p258, %p259
      %p261 = scmp.ne.s32.totalorder %s252, %s253
      %p262 = scmp.eq.s32.totalorder %s43, 0
      %p263 = por %p261, %p262
      %p264 = scmp.ne.s32.totalorder %s252, %s253
      %p265 = scmp.eq.s32.totalorder %s44, 7
      %p266 = por %p264, %p265
      %p268 = scmp.ne.s32.totalorder %s253, %s267
      %p269 = scmp.eq.s32.totalorder %s44, 0
      %p270 = por %p268, %p269
      %s272 = sadd.s32 %s271, 1
      %p275 = scmp.eq.s32.totalorder %s38, 7
      %p276 = scmp.ne.s32.totalorder %s271, %s273
      %p277 = scmp.eq.s32.totalorder %s38, 0
      %p278 = por %p276, %p277
      %p279 = scmp.ne.s32.totalorder %s271, %s273
      %p280 = scmp.eq.s32.totalorder %s43, 7
      %p281 = por %p279, %p280
      %p282 = scmp.ne.s32.totalorder %s273, %s274
      %p283 = scmp.eq.s32.totalorder %s43, 0
      %p284 = por %p282, %p283
      %p285 = scmp.ne.s32.totalorder %s273, %s274
      %p286 = scmp.eq.s32.totalorder %s44, 7
      %p287 = por %p285, %p286
      %p289 = scmp.ne.s32.totalorder %s274, %s288
      %p290 = scmp.eq.s32.totalorder %s44, 0
      %p291 = por %p289, %p290
      %s293 = sadd.s32 %s292, 1
      %p296 = scmp.eq.s32.totalorder %s38, 7
      %p297 = scmp.ne.s32.totalorder %s292, %s294
      %p298 = scmp.eq.s32.totalorder %s38, 0
      %p299 = por %p297, %p298
      %p300 = scmp.ne.s32.totalorder %s292, %s294
      %p301 = scmp.eq.s32.totalorder %s43, 7
      %p302 = por %p300, %p301
      %p303 = scmp.ne.s32.totalorder %s294, %s295
      %p304 = scmp.eq.s32.totalorder %s43, 0
      %p305 = por %p303, %p304
      %p306 = scmp.ne.s32.totalorder %s294, %s295
      %p307 = scmp.eq.s32.totalorder %s44, 7
      %p308 = por %p306, %p307
      %p310 = scmp.ne.s32.totalorder %s295, %s309
      %p311 = scmp.eq.s32.totalorder %s44, 0
      %p312 = por %p310, %p311
      %s314 = sadd.s32 %s313, 1
      %p317 = scmp.eq.s32.totalorder %s38, 7
      %p318 = scmp.ne.s32.totalorder %s313, %s315
      %p319 = scmp.eq.s32.totalorder %s38, 0
      %p320 = por %p318, %p319
      %p321 = scmp.ne.s32.totalorder %s313, %s315
      %p322 = scmp.eq.s32.totalorder %s43, 7
      %p323 = por %p321, %p322
      %p324 = scmp.ne.s32.totalorder %s315, %s316
      %p325 = scmp.eq.s32.totalorder %s43, 0
      %p326 = por %p324, %p325
      %p327 = scmp.ne.s32.totalorder %s315, %s316
      %p328 = scmp.eq.s32.totalorder %s44, 7
      %p329 = por %p327, %p328
      %p331 = scmp.ne.s32.totalorder %s316, %s330
      %p332 = scmp.eq.s32.totalorder %s44, 0
      %p333 = por %p331, %p332
      %s335 = sadd.s32 %s334, 1
      %p338 = scmp.eq.s32.totalorder %s38, 7
      %p339 = scmp.ne.s32.totalorder %s334, %s336
      %p340 = scmp.eq.s32.totalorder %s38, 0
      %p341 = por %p339, %p340
      %p342 = scmp.ne.s32.totalorder %s334, %s336
      %p343 = scmp.eq.s32.totalorder %s43, 7
      %p344 = por %p342, %p343
      %p345 = scmp.ne.s32.totalorder %s336, %s337
      %p346 = scmp.eq.s32.totalorder %s43, 0
      %p347 = por %p345, %p346
      %p348 = scmp.ne.s32.totalorder %s336, %s337
      %p349 = scmp.eq.s32.totalorder %s44, 7
      %p350 = por %p348, %p349
      %p352 = scmp.ne.s32.totalorder %s337, %s351
      %p353 = scmp.eq.s32.totalorder %s44, 0
      %p354 = por %p352, %p353
      %s356 = sadd.s32 %s355, 1
      %p359 = scmp.eq.s32.totalorder %s38, 7
      %p360 = scmp.ne.s32.totalorder %s355, %s357
      %p361 = scmp.eq.s32.totalorder %s38, 0
      %p362 = por %p360, %p361
      %p363 = scmp.ne.s32.totalorder %s355, %s357
      %p364 = scmp.eq.s32.totalorder %s43, 7
      %p365 = por %p363, %p364
      %p366 = scmp.ne.s32.totalorder %s357, %s358
      %p367 = scmp.eq.s32.totalorder %s43, 0
      %p368 = por %p366, %p367
      %p369 = scmp.ne.s32.totalorder %s357, %s358
      %p370 = scmp.eq.s32.totalorder %s44, 7
      %p371 = por %p369, %p370
      %p373 = scmp.ne.s32.totalorder %s358, %s372
      %p374 = scmp.eq.s32.totalorder %s44, 0
      %p375 = por %p373, %p374
      %s377 = sadd.s32 %s376, 1
      %p380 = scmp.eq.s32.totalorder %s38, 7
      %p381 = scmp.ne.s32.totalorder %s376, %s378
      %p382 = scmp.eq.s32.totalorder %s38, 0
      %p383 = por %p381, %p382
      %p384 = scmp.ne.s32.totalorder %s376, %s378
      %p385 = scmp.eq.s32.totalorder %s43, 7
      %p386 = por %p384, %p385
      %p387 = scmp.ne.s32.totalorder %s378, %s379
      %p388 = scmp.eq.s32.totalorder %s43, 0
      %p389 = por %p387, %p388
      %p390 = scmp.ne.s32.totalorder %s378, %s379
      %p391 = scmp.eq.s32.totalorder %s44, 7
      %p392 = por %p390, %p391
      %p394 = scmp.ne.s32.totalorder %s379, %s393
      %p395 = scmp.eq.s32.totalorder %s44, 0
      %p396 = por %p394, %p395
      %s398 = sadd.s32 %s397, 1
      %p401 = scmp.eq.s32.totalorder %s38, 7
      %p402 = scmp.ne.s32.totalorder %s397, %s399
      %p403 = scmp.eq.s32.totalorder %s38, 0
      %p404 = por %p402, %p403
      %p405 = scmp.ne.s32.totalorder %s397, %s399
      %p406 = scmp.eq.s32.totalorder %s43, 7
      %p407 = por %p405, %p406
      %p408 = scmp.ne.s32.totalorder %s399, %s400
      %p409 = scmp.eq.s32.totalorder %s43, 0
      %p410 = por %p408, %p409
      %p411 = scmp.ne.s32.totalorder %s399, %s400
      %p412 = scmp.eq.s32.totalorder %s44, 7
      %p413 = por %p411, %p412
      %p415 = scmp.ne.s32.totalorder %s400, %s414
      %p416 = scmp.eq.s32.totalorder %s44, 0
      %p417 = por %p415, %p416
      %s419 = sadd.s32 %s418, 1
      %p422 = scmp.eq.s32.totalorder %s38, 7
      %p423 = scmp.ne.s32.totalorder %s418, %s420
      %p424 = scmp.eq.s32.totalorder %s38, 0
      %p425 = por %p423, %p424
      %p426 = scmp.ne.s32.totalorder %s418, %s420
      %p427 = scmp.eq.s32.totalorder %s43, 7
      %p428 = por %p426, %p427
      %p429 = scmp.ne.s32.totalorder %s420, %s421
      %p430 = scmp.eq.s32.totalorder %s43, 0
      %p431 = por %p429, %p430
      %p432 = scmp.ne.s32.totalorder %s420, %s421
      %p433 = scmp.eq.s32.totalorder %s44, 7
      %p434 = por %p432, %p433
      %p436 = scmp.ne.s32.totalorder %s421, %s435
      %p437 = scmp.eq.s32.totalorder %s44, 0
      %p438 = por %p436, %p437
      %s439 = ssub.s32 %s38, %s45
      %p440 = scmp.eq.s32.totalorder %s439, 0
      %s442 = sadd.s32 %s441, 1
      %s443 = scalar_select %p440, %s441, %s442
      %p446 = pneg %p440
      %p447 = scmp.eq.s32.totalorder %s38, 7
      %p448 = por %p446, %p447
      %p449 = scmp.ne.s32.totalorder %s441, %s444
      %p450 = scmp.eq.s32.totalorder %s38, 0
      %p451 = por %p449, %p450
      %p452 = scmp.ne.s32.totalorder %s441, %s444
      %p453 = scmp.eq.s32.totalorder %s43, 7
      %p454 = por %p452, %p453
      %p455 = scmp.ne.s32.totalorder %s444, %s445
      %p456 = scmp.eq.s32.totalorder %s43, 0
      %p457 = por %p455, %p456
      %p458 = scmp.ne.s32.totalorder %s444, %s445
      %p459 = scmp.eq.s32.totalorder %s44, 7
      %p460 = por %p458, %p459
      %p462 = scmp.ne.s32.totalorder %s445, %s461
      %p463 = scmp.eq.s32.totalorder %s44, 0
      %p464 = por %p462, %p463
      %s465 = ssub.s32 %s38, %s45
      %p466 = scmp.eq.s32.totalorder %s465, 0
      %s468 = sadd.s32 %s467, 1
      %s469 = scalar_select %p466, %s467, %s468
      %p472 = pneg %p466
      %p473 = scmp.eq.s32.totalorder %s38, 7
      %p474 = por %p472, %p473
      %p475 = scmp.ne.s32.totalorder %s467, %s470
      %p476 = scmp.eq.s32.totalorder %s38, 0
      %p477 = por %p475, %p476
      %p478 = scmp.ne.s32.totalorder %s467, %s470
      %p479 = scmp.eq.s32.totalorder %s43, 7
      %p480 = por %p478, %p479
      %p481 = scmp.ne.s32.totalorder %s470, %s471
      %p482 = scmp.eq.s32.totalorder %s43, 0
      %p483 = por %p481, %p482
      %p484 = scmp.ne.s32.totalorder %s470, %s471
      %p485 = scmp.eq.s32.totalorder %s44, 7
      %p486 = por %p484, %p485
      %p488 = scmp.ne.s32.totalorder %s471, %s487
      %p489 = scmp.eq.s32.totalorder %s44, 0
      %p490 = por %p488, %p489
      %p491 = scmp.le.s32.totalorder 1, %s38
      %p492 = scmp.lt.s32.totalorder %s38, 9
      %p493 = pnand %p491, %p492
      %p494 = pneg %p493
      // Predicated region
      $region9: #{dialogue_rnn_forward.1} parent=5 // pred_check
        _
      $region10: #{dialogue_rnn_forward.1} parent=5 // pred_check_branch
        %496 = sbr.rel (%p493) target = $region12
      $region11: #{dialogue_rnn_forward.1} parent=5 // pred_region
        %s497 = ssub.s32 %s38, 1
        // Predicated region
        $region13: #{dialogue_rnn_forward.1} parent=11 // pred_check
          %p498 = pneg %p137
        $region14: #{dialogue_rnn_forward.1} parent=11 // pred_check_branch
          %500 = sbr.rel (%p498) target = $region16
        $region15: #{dialogue_rnn_forward.1} parent=11 // pred_region
          _
        $region16: #{dialogue_rnn_forward.1} parent=11 // pred_fallthru
          _
        // Predicated region
        $region17: #{dialogue_rnn_forward.1} parent=11 // pred_check
          %p501 = pneg %p158
        $region18: #{dialogue_rnn_forward.1} parent=11 // pred_check_branch
          %503 = sbr.rel (%p501) target = $region20
        $region19: #{dialogue_rnn_forward.1} parent=11 // pred_region
          _
        $region20: #{dialogue_rnn_forward.1} parent=11 // pred_fallthru
          _
        // Predicated region
        $region21: #{dialogue_rnn_forward.1} parent=11 // pred_check
          %p504 = pneg %p179
        $region22: #{dialogue_rnn_forward.1} parent=11 // pred_check_branch
          %506 = sbr.rel (%p504) target = $region24
        $region23: #{dialogue_rnn_forward.1} parent=11 // pred_region
          %s508 = ssub.s32 512, 512
          %509 = vsyncadd [#allocation9], %s508
          %s510 = sshll.u32 [#allocation8], 4
          %s511 = int_to_ptr.vmem [resolvable:$true] %s510
          %516 = dma.hbm_to_vmem [thread:$0]  %s5, 512, %s511, [#allocation9], 128, 128, 8
        $region24: #{dialogue_rnn_forward.1} parent=11 // pred_fallthru
          _
        // Predicated region
        $region25: #{dialogue_rnn_forward.1} parent=11 // pred_check
          %p517 = pneg %p200
        $region26: #{dialogue_rnn_forward.1} parent=11 // pred_check_branch
          %519 = sbr.rel (%p517) target = $region28
        $region27: #{dialogue_rnn_forward.1} parent=11 // pred_region
          _
        $region28: #{dialogue_rnn_forward.1} parent=11 // pred_fallthru
          _
        // Predicated region
        $region29: #{dialogue_rnn_forward.1} parent=11 // pred_check
          %p520 = pneg %p221
        $region30: #{dialogue_rnn_forward.1} parent=11 // pred_check_branch
          %522 = sbr.rel (%p520) target = $region32
        $region31: #{dialogue_rnn_forward.1} parent=11 // pred_region
          %s524 = ssub.s32 16, 16
          %525 = vsyncadd [#allocation9], %s524
          %s527 = sshll.u32 [#allocation10], 4
          %s528 = int_to_ptr.vmem [resolvable:$true] %s527
          %530 = dma.hbm_to_vmem [thread:$0]  %s7, 16, %s528, [#allocation9]
        $region32: #{dialogue_rnn_forward.1} parent=11 // pred_fallthru
          _
        // Predicated region
        $region33: #{dialogue_rnn_forward.1} parent=11 // pred_check
          %p531 = pneg %p242
        $region34: #{dialogue_rnn_forward.1} parent=11 // pred_check_branch
          %533 = sbr.rel (%p531) target = $region36
        $region35: #{dialogue_rnn_forward.1} parent=11 // pred_region
          _
        $region36: #{dialogue_rnn_forward.1} parent=11 // pred_fallthru
          _
        // Predicated region
        $region37: #{dialogue_rnn_forward.1} parent=11 // pred_check
          %p534 = pneg %p263
        $region38: #{dialogue_rnn_forward.1} parent=11 // pred_check_branch
          %536 = sbr.rel (%p534) target = $region40
        $region39: #{dialogue_rnn_forward.1} parent=11 // pred_region
          %s538 = ssub.s32 512, 512
          %539 = vsyncadd [#allocation12], %s538
          %s540 = sshll.u32 [#allocation11], 4
          %s541 = int_to_ptr.vmem [resolvable:$true] %s540
          %546 = dma.hbm_to_vmem [thread:$0]  %s9, 512, %s541, [#allocation12], 128, 128, 8
        $region40: #{dialogue_rnn_forward.1} parent=11 // pred_fallthru
          _
        // Predicated region
        $region41: #{dialogue_rnn_forward.1} parent=11 // pred_check
          %p547 = pneg %p284
        $region42: #{dialogue_rnn_forward.1} parent=11 // pred_check_branch
          %549 = sbr.rel (%p547) target = $region44
        $region43: #{dialogue_rnn_forward.1} parent=11 // pred_region
          %s551 = ssub.s32 512, 512
          %552 = vsyncadd [#allocation12], %s551
          %s553 = sshll.u32 [#allocation13], 4
          %s554 = int_to_ptr.vmem [resolvable:$true] %s553
          %559 = dma.hbm_to_vmem [thread:$0]  %s10, 512, %s554, [#allocation12], 128, 128, 8
        $region44: #{dialogue_rnn_forward.1} parent=11 // pred_fallthru
          _
        // Predicated region
        $region45: #{dialogue_rnn_forward.1} parent=11 // pred_check
          %p560 = pneg %p305
        $region46: #{dialogue_rnn_forward.1} parent=11 // pred_check_branch
          %562 = sbr.rel (%p560) target = $region48
        $region47: #{dialogue_rnn_forward.1} parent=11 // pred_region
          %s564 = ssub.s32 16, 16
          %565 = vsyncadd [#allocation15], %s564
          %s567 = sshll.u32 [#allocation14], 4
          %s568 = int_to_ptr.vmem [resolvable:$true] %s567
          %570 = dma.hbm_to_vmem [thread:$0]  %s11, 16, %s568, [#allocation15]
        $region48: #{dialogue_rnn_forward.1} parent=11 // pred_fallthru
          _
        // Predicated region
        $region49: #{dialogue_rnn_forward.1} parent=11 // pred_check
          %p571 = pneg %p326
        $region50: #{dialogue_rnn_forward.1} parent=11 // pred_check_branch
          %573 = sbr.rel (%p571) target = $region52
        $region51: #{dialogue_rnn_forward.1} parent=11 // pred_region
          %s575 = ssub.s32 16, 16
          %576 = vsyncadd [#allocation15], %s575
          %s578 = sshll.u32 [#allocation16], 4
          %s579 = int_to_ptr.vmem [resolvable:$true] %s578
          %581 = dma.hbm_to_vmem [thread:$0]  %s12, 16, %s579, [#allocation15]
        $region52: #{dialogue_rnn_forward.1} parent=11 // pred_fallthru
          _
        // Predicated region
        $region53: #{dialogue_rnn_forward.1} parent=11 // pred_check
          %p582 = pneg %p347
        $region54: #{dialogue_rnn_forward.1} parent=11 // pred_check_branch
          %584 = sbr.rel (%p582) target = $region56
        $region55: #{dialogue_rnn_forward.1} parent=11 // pred_region
          %s586 = ssub.s32 512, 512
          %587 = vsyncadd [#allocation18], %s586
          %s588 = sshll.u32 [#allocation17], 4
          %s589 = int_to_ptr.vmem [resolvable:$true] %s588
          %594 = dma.hbm_to_vmem [thread:$0]  %s13, 512, %s589, [#allocation18], 128, 128, 8
        $region56: #{dialogue_rnn_forward.1} parent=11 // pred_fallthru
          _
        // Predicated region
        $region57: #{dialogue_rnn_forward.1} parent=11 // pred_check
          %p595 = pneg %p368
        $region58: #{dialogue_rnn_forward.1} parent=11 // pred_check_branch
          %597 = sbr.rel (%p595) target = $region60
        $region59: #{dialogue_rnn_forward.1} parent=11 // pred_region
          %s599 = ssub.s32 512, 512
          %600 = vsyncadd [#allocation18], %s599
          %s601 = sshll.u32 [#allocation19], 4
          %s602 = int_to_ptr.vmem [resolvable:$true] %s601
          %607 = dma.hbm_to_vmem [thread:$0]  %s14, 512, %s602, [#allocation18], 128, 128, 8
        $region60: #{dialogue_rnn_forward.1} parent=11 // pred_fallthru
          _
        // Predicated region
        $region61: #{dialogue_rnn_forward.1} parent=11 // pred_check
          %p608 = pneg %p389
        $region62: #{dialogue_rnn_forward.1} parent=11 // pred_check_branch
          %610 = sbr.rel (%p608) target = $region64
        $region63: #{dialogue_rnn_forward.1} parent=11 // pred_region
          %s612 = ssub.s32 16, 16
          %613 = vsyncadd [#allocation21], %s612
          %s615 = sshll.u32 [#allocation20], 4
          %s616 = int_to_ptr.vmem [resolvable:$true] %s615
          %618 = dma.hbm_to_vmem [thread:$0]  %s15, 16, %s616, [#allocation21]
        $region64: #{dialogue_rnn_forward.1} parent=11 // pred_fallthru
          _
        // Predicated region
        $region65: #{dialogue_rnn_forward.1} parent=11 // pred_check
          %p619 = pneg %p410
        $region66: #{dialogue_rnn_forward.1} parent=11 // pred_check_branch
          %621 = sbr.rel (%p619) target = $region68
        $region67: #{dialogue_rnn_forward.1} parent=11 // pred_region
          %s623 = ssub.s32 16, 16
          %624 = vsyncadd [#allocation21], %s623
          %s626 = sshll.u32 [#allocation22], 4
          %s627 = int_to_ptr.vmem [resolvable:$true] %s626
          %629 = dma.hbm_to_vmem [thread:$0]  %s16, 16, %s627, [#allocation21]
        $region68: #{dialogue_rnn_forward.1} parent=11 // pred_fallthru
          _
        // Predicated region
        $region69: #{dialogue_rnn_forward.1} parent=11 // pred_check
          %p630 = pneg %p431
        $region70: #{dialogue_rnn_forward.1} parent=11 // pred_check_branch
          %632 = sbr.rel (%p630) target = $region72
        $region71: #{dialogue_rnn_forward.1} parent=11 // pred_region
          %s634 = ssub.s32 16, 16
          %635 = vsyncadd [#allocation24], %s634
          %s637 = sshll.u32 [#allocation23], 4
          %s638 = int_to_ptr.vmem [resolvable:$true] %s637
          %640 = dma.hbm_to_vmem [thread:$0]  %s17, 16, %s638, [#allocation24]
        $region72: #{dialogue_rnn_forward.1} parent=11 // pred_fallthru
          _
      $region12: #{dialogue_rnn_forward.1} parent=5 // pred_fallthru
        _
      %p641 = scmp.lt.s32.totalorder %s38, 8
      // Predicated region
      $region73: #{dialogue_rnn_forward.1} parent=5 // pred_check
        %p642 = pneg %p641
      $region74: #{dialogue_rnn_forward.1} parent=5 // pred_check_branch
        %644 = sbr.rel (%p642) target = $region76
      $region75: #{dialogue_rnn_forward.1} parent=5 // pred_region
        // Predicated region
        $region77: #{dialogue_rnn_forward.1} parent=75 // pred_check
          %p645 = pneg %p58
        $region78: #{dialogue_rnn_forward.1} parent=75 // pred_check_branch
          %647 = sbr.rel (%p645) target = $region80
        $region79: #{dialogue_rnn_forward.1} parent=75 // pred_region
          %s648 = sand.u32 %s48, 1
          %s649 = scalar_lea.sflag [#allocation6], %s648
          %s650 = sand.u32 %s48, 1
          %s651 = smul.addr %s650, 2
          %s652 = scalar_lea.vmem [#allocation5], %s651
          %s654 = ssub.s32 32, 32
          %655 = vsyncadd %s649, %s654
          %s656 = smul.addr %s38, 32
          %s657 = scalar_lea.hbm %s0, %s656
          %s659 = sshll.u32 %s652, 4
          %s660 = int_to_ptr.vmem [resolvable:$true] %s659
          %662 = dma.hbm_to_vmem [thread:$0]  %s657, 32, %s660, %s649
        $region80: #{dialogue_rnn_forward.1} parent=75 // pred_fallthru
          _
        // Predicated region
        $region81: #{dialogue_rnn_forward.1} parent=75 // pred_check
          %p663 = pneg %p84
        $region82: #{dialogue_rnn_forward.1} parent=75 // pred_check_branch
          %665 = sbr.rel (%p663) target = $region84
        $region83: #{dialogue_rnn_forward.1} parent=75 // pred_region
          %p666 = scmp.lt.s32.totalorder %s38, 7
          %s667 = scalar_select %p666, %s38, 7
          %s668 = smul.addr %s667, 2
          %s669 = scalar_lea.vmem %s1, %s668
        $region84: #{dialogue_rnn_forward.1} parent=75 // pred_fallthru
          _
        // Predicated region
        $region85: #{dialogue_rnn_forward.1} parent=75 // pred_check
          %p670 = pneg %p110
        $region86: #{dialogue_rnn_forward.1} parent=75 // pred_check_branch
          %672 = sbr.rel (%p670) target = $region88
        $region87: #{dialogue_rnn_forward.1} parent=75 // pred_region
          %p673 = scmp.lt.s32.totalorder %s38, 7
          %s674 = scalar_select %p673, %s38, 7
          %s675 = smul.addr %s674, 4
          %s676 = scalar_lea.vmem %s2, %s675
        $region88: #{dialogue_rnn_forward.1} parent=75 // pred_fallthru
          _
      $region76: #{dialogue_rnn_forward.1} parent=5 // pred_fallthru
        _
      %p677 = scmp.le.s32.totalorder 1, %s38
      %p678 = scmp.lt.s32.totalorder %s38, 9
      %p679 = pnand %p677, %p678
      %p680 = pneg %p679
      // Predicated region
      $region89: #{dialogue_rnn_forward.1} parent=5 // pred_check
        _
      $region90: #{dialogue_rnn_forward.1} parent=5 // pred_check_branch
        %682 = sbr.rel (%p679) target = $region92
      $region91: #{dialogue_rnn_forward.1} parent=5 // pred_region
        %s683 = ssub.s32 %s38, 1
        %s684 = sand.u32 %s51, 1
        %s685 = scalar_lea.sflag [#allocation6], %s684
        %s686 = sand.u32 %s51, 1
        %s687 = smul.addr %s686, 2
        %s688 = scalar_lea.vmem [#allocation5], %s687
        // Predicated region
        $region93: #{dialogue_rnn_forward.1} parent=91 // pred_check
          %p689 = pneg %p64
        $region94: #{dialogue_rnn_forward.1} parent=91 // pred_check_branch
          %691 = sbr.rel (%p689) target = $region96
        $region95: #{dialogue_rnn_forward.1} parent=91 // pred_region
          %692 = dma.done %s685, 32
        $region96: #{dialogue_rnn_forward.1} parent=91 // pred_fallthru
          _
        // Predicated region
        $region97: #{dialogue_rnn_forward.1} parent=91 // pred_check
          %p693 = pneg %p179
        $region98: #{dialogue_rnn_forward.1} parent=91 // pred_check_branch
          %695 = sbr.rel (%p693) target = $region100
        $region99: #{dialogue_rnn_forward.1} parent=91 // pred_region
          %696 = dma.done [#allocation9], 512
        $region100: #{dialogue_rnn_forward.1} parent=91 // pred_fallthru
          _
        // Predicated region
        $region101: #{dialogue_rnn_forward.1} parent=91 // pred_check
          %p697 = pneg %p221
        $region102: #{dialogue_rnn_forward.1} parent=91 // pred_check_branch
          %699 = sbr.rel (%p697) target = $region104
        $region103: #{dialogue_rnn_forward.1} parent=91 // pred_region
          %700 = dma.done [#allocation9], 16
        $region104: #{dialogue_rnn_forward.1} parent=91 // pred_fallthru
          _
        // Predicated region
        $region105: #{dialogue_rnn_forward.1} parent=91 // pred_check
          %p701 = pneg %p263
        $region106: #{dialogue_rnn_forward.1} parent=91 // pred_check_branch
          %703 = sbr.rel (%p701) target = $region108
        $region107: #{dialogue_rnn_forward.1} parent=91 // pred_region
          %704 = dma.done [#allocation12], 512
        $region108: #{dialogue_rnn_forward.1} parent=91 // pred_fallthru
          _
        // Predicated region
        $region109: #{dialogue_rnn_forward.1} parent=91 // pred_check
          %p705 = pneg %p284
        $region110: #{dialogue_rnn_forward.1} parent=91 // pred_check_branch
          %707 = sbr.rel (%p705) target = $region112
        $region111: #{dialogue_rnn_forward.1} parent=91 // pred_region
          %708 = dma.done [#allocation12], 512
        $region112: #{dialogue_rnn_forward.1} parent=91 // pred_fallthru
          _
        // Predicated region
        $region113: #{dialogue_rnn_forward.1} parent=91 // pred_check
          %p709 = pneg %p305
        $region114: #{dialogue_rnn_forward.1} parent=91 // pred_check_branch
          %711 = sbr.rel (%p709) target = $region116
        $region115: #{dialogue_rnn_forward.1} parent=91 // pred_region
          %712 = dma.done [#allocation15], 16
        $region116: #{dialogue_rnn_forward.1} parent=91 // pred_fallthru
          _
        // Predicated region
        $region117: #{dialogue_rnn_forward.1} parent=91 // pred_check
          %p713 = pneg %p326
        $region118: #{dialogue_rnn_forward.1} parent=91 // pred_check_branch
          %715 = sbr.rel (%p713) target = $region120
        $region119: #{dialogue_rnn_forward.1} parent=91 // pred_region
          %716 = dma.done [#allocation15], 16
        $region120: #{dialogue_rnn_forward.1} parent=91 // pred_fallthru
          _
        // Predicated region
        $region121: #{dialogue_rnn_forward.1} parent=91 // pred_check
          %p717 = pneg %p347
        $region122: #{dialogue_rnn_forward.1} parent=91 // pred_check_branch
          %719 = sbr.rel (%p717) target = $region124
        $region123: #{dialogue_rnn_forward.1} parent=91 // pred_region
          %720 = dma.done [#allocation18], 512
        $region124: #{dialogue_rnn_forward.1} parent=91 // pred_fallthru
          _
        // Predicated region
        $region125: #{dialogue_rnn_forward.1} parent=91 // pred_check
          %p721 = pneg %p368
        $region126: #{dialogue_rnn_forward.1} parent=91 // pred_check_branch
          %723 = sbr.rel (%p721) target = $region128
        $region127: #{dialogue_rnn_forward.1} parent=91 // pred_region
          %724 = dma.done [#allocation18], 512
        $region128: #{dialogue_rnn_forward.1} parent=91 // pred_fallthru
          _
        // Predicated region
        $region129: #{dialogue_rnn_forward.1} parent=91 // pred_check
          %p725 = pneg %p389
        $region130: #{dialogue_rnn_forward.1} parent=91 // pred_check_branch
          %727 = sbr.rel (%p725) target = $region132
        $region131: #{dialogue_rnn_forward.1} parent=91 // pred_region
          %728 = dma.done [#allocation21], 16
        $region132: #{dialogue_rnn_forward.1} parent=91 // pred_fallthru
          _
        // Predicated region
        $region133: #{dialogue_rnn_forward.1} parent=91 // pred_check
          %p729 = pneg %p410
        $region134: #{dialogue_rnn_forward.1} parent=91 // pred_check_branch
          %731 = sbr.rel (%p729) target = $region136
        $region135: #{dialogue_rnn_forward.1} parent=91 // pred_region
          %732 = dma.done [#allocation21], 16
        $region136: #{dialogue_rnn_forward.1} parent=91 // pred_fallthru
          _
        // Predicated region
        $region137: #{dialogue_rnn_forward.1} parent=91 // pred_check
          %p733 = pneg %p431
        $region138: #{dialogue_rnn_forward.1} parent=91 // pred_check_branch
          %735 = sbr.rel (%p733) target = $region140
        $region139: #{dialogue_rnn_forward.1} parent=91 // pred_region
          %736 = dma.done [#allocation24], 16
        $region140: #{dialogue_rnn_forward.1} parent=91 // pred_fallthru
          _
        %s737 = sand.u32 %s51, 1
        %s738 = scalar_lea.sflag [#allocation6], %s737
        %s739 = sand.u32 %s51, 1
        %s740 = smul.addr %s739, 2
        %s741 = scalar_lea.vmem [#allocation5], %s740
        %p742 = pneg %p64
        %p743 = pneg %p61
        %p744 = scmp.lt.s32.totalorder %s43, 7
        %s745 = scalar_select %p744, %s43, 7
        %s746 = smul.addr %s745, 2
        %s747 = scalar_lea.vmem %s1, %s746
        %p748 = pneg %p90
        %p749 = pneg %p87
        %p750 = scmp.lt.s32.totalorder %s43, 7
        %s751 = scalar_select %p750, %s43, 7
        %s752 = smul.addr %s751, 4
        %s753 = scalar_lea.vmem %s2, %s752
        %p754 = pneg %p116
        %p755 = pneg %p113
        %p756 = pneg %p137
        %p757 = pneg %p134
        %p758 = pneg %p158
        %p759 = pneg %p155
        %p760 = pneg %p179
        %p761 = pneg %p176
        %p762 = pneg %p200
        %p763 = pneg %p197
        %p764 = pneg %p221
        %p765 = pneg %p218
        %p766 = pneg %p242
        %p767 = pneg %p239
        %p768 = pneg %p263
        %p769 = pneg %p260
        %p770 = pneg %p284
        %p771 = pneg %p281
        %p772 = pneg %p305
        %p773 = pneg %p302
        %p774 = pneg %p326
        %p775 = pneg %p323
        %p776 = pneg %p347
        %p777 = pneg %p344
        %p778 = pneg %p368
        %p779 = pneg %p365
        %p780 = pneg %p389
        %p781 = pneg %p386
        %p782 = pneg %p410
        %p783 = pneg %p407
        %p784 = pneg %p431
        %p785 = pneg %p428
        %p786 = pneg %p457
        %p787 = pneg %p454
        %s788 = sand.u32 %s444, 1
        %s789 = scalar_lea.sflag [#allocation7], %s788
        %s790 = sand.u32 %s444, 1
        %s791 = smul.addr %s790, 2
        %s792 = scalar_lea.vmem [#allocation25], %s791
        %p793 = pneg %p483
        %p794 = pneg %p480
        %p795 = scmp.lt.s32.totalorder %s43, 7
        %s796 = scalar_select %p795, %s43, 7
        %s797 = smul.addr %s796, 8
        %s798 = smul.addr %s797, 2
        %s799 = scalar_lea.vmem %s19, %s798
        %p800 = scmp.lt.s32.totalorder %s43, 7
        %s801 = scalar_select %p800, %s43, 7
        %s802 = smul.addr %s801, 2
        %s803 = scalar_lea.vmem %s1, %s802
        %p804 = scmp.lt.s32.totalorder %s43, 7
        %s805 = scalar_select %p804, %s43, 7
        %s806 = smul.addr %s805, 4
        %s807 = scalar_lea.vmem %s2, %s806
        %p808 = scmp.lt.s32.totalorder %s43, 7
        %s809 = scalar_select %p808, %s43, 7
        %s810 = smul.addr %s809, 8
        %s811 = smul.addr %s810, 2
        %s812 = scalar_lea.vmem %s19, %s811
        %p813 = scmp.eq.s32.totalorder %s43, 0
        // Predicated region
        $region141: #{dialogue_rnn_forward.1} parent=91 // pred_check
          %p814 = pneg %p813
        $region142: #{dialogue_rnn_forward.1} parent=91 // pred_check_branch
          %816 = sbr.rel (%p814) target = $region144
        $region143: #{dialogue_rnn_forward.1} parent=91 // pred_region
          %vm817 = vcmask 254976
          %818 = vst.msk [vmem:[#allocation2] sm:$0x3] %vm817, 0.0
          %819 = vst.msk [vmem:[#allocation2 + $0x2] sm:$0x3] %vm817, 0.0
          %820 = vst.msk [vmem:[#allocation2 + $0x4] sm:$0x3] %vm817, 0.0
          %821 = vst.msk [vmem:[#allocation2 + $0x6] sm:$0x3] %vm817, 0.0
          %822 = vst.msk [vmem:[#allocation2 + $0x8] sm:$0x3] %vm817, 0.0
          %823 = vst.msk [vmem:[#allocation2 + $0xa] sm:$0x3] %vm817, 0.0
          %824 = vst.msk [vmem:[#allocation2 + $0xc] sm:$0x3] %vm817, 0.0
          %825 = vst.msk [vmem:[#allocation2 + $0xe] sm:$0x3] %vm817, 0.0
          %vm826 = vcmask 257024
          %827 = vst.msk [vmem:[#allocation3] sm:$0xf] %vm826, 0.0
          %828 = vst.msk [vmem:[#allocation4] sm:$0x3] %vm817, 0.0
        $region144: #{dialogue_rnn_forward.1} parent=91 // pred_fallthru
          _
        %v829 = vld [vmem:[%s688] sm:$0x3]
        %v830 = vld [vmem:[%s803] sm:$0x3]
        %v831 = vld [vmem:[%s807] sm:$0xf]
        %v832 = vld [vmem:[#allocation3] sm:$0xf]
        %v833 = vlaneseq
        %v834 = vand.u32 %v833, 127
        %v835 = vcvt.s32.f32 %v834
        %vm836 = vcmask 9216
        %v837 = vsel %vm836, %v830, -inf
        %838 = vmax.xlane.f32.xlu0 %v837
        %v839 = vpop.xlane.xlu0 %838
        %vm840 = vcmp.eq.f32.partialorder %v830, %v839
        %v841 = vsel %vm840, %v835, 2.0
        %v842 = vsel %vm836, %v841, inf
        %843 = vmin.xlane.f32.xlu0 %v842
        %v844 = vpop.xlane.xlu0 %843
        %v845 = vlaneseq
        %v846 = vshrl.u32 %v845, 7
        %v847 = vcvt.s32.f32 %v846
        %v848 = vmul.f32 %v847, 2.0
        %v849 = vadd.f32 %v848, %v844
        %vm850 = vcmp.eq.f32.partialorder %v835, %v849
        %v851 = vsel %vm850, 1, 0
        %v852 = vcvt.s32.f32 %v851
        %v853 = vmul.f32 %v835, 2.0
        %vm854 = vcmp.ge.f32.partialorder %v847, %v853
        %v855 = vadd.f32 %v835, 1.0
        %v856 = vmul.f32 %v855, 2.0
        %vm857 = vcmp.lt.f32.partialorder %v847, %v856
        %vm858 = vmand %vm854, %vm857
        %v859 = vsel %vm858, 1, 0
        %v860 = vcvt.s32.f32 %v859
        %vm861 = vcmask 31744
        %v863 = vsel %vm861, %v852, 0
        %vm865 = vcmask 1043456
        %v867 = vsel %vm865, %v832, 0
        %869 = vmatprep.subr.mxu0 0.0
        %870 = vmatpush1.msra.mxu0 %v867
        %871 = vmatprep.subr.mxu0 0.0
        %872 = vmatpush1.msra.mxu0 0.0
        %873 = vmatprep.subr.mxu0 0.0
        %874 = vmatpush1.msra.mxu0 0.0
        %875 = vmatprep.subr.mxu0 0.0
        %876 = vmatpush1.msra.mxu0 0.0
        %877 = vmatprep.subr.mxu0 0.0
        %878 = vmatpush1.msra.mxu0 0.0
        %879 = vmatprep.subr.mxu0 0.0
        %880 = vmatpush1.msra.mxu0 0.0
        %881 = vmatprep.subr.mxu0 0.0
        %882 = vmatpush1.msra.mxu0 0.0
        %883 = vmatprep.subr.mxu0 0.0
        %884 = vmatpush1.msra.mxu0 0.0
        %885 = vmatprep.subr.mxu0 0.0
        %886 = vmatpush1.msra.mxu0 0.0
        %887 = vmatprep.subr.mxu0 0.0
        %888 = vmatpush1.msra.mxu0 0.0
        %889 = vmatprep.subr.mxu0 0.0
        %890 = vmatpush1.msra.mxu0 0.0
        %891 = vmatprep.subr.mxu0 0.0
        %892 = vmatpush1.msra.mxu0 0.0
        %893 = vmatprep.subr.mxu0 0.0
        %894 = vmatpush1.msra.mxu0 0.0
        %895 = vmatprep.subr.mxu0 0.0
        %896 = vmatpush1.msra.mxu0 0.0
        %897 = vmatprep.subr.mxu0 0.0
        %898 = vmatpush1.msra.mxu0 0.0
        %899 = vmatprep.subr.mxu0 0.0
        %900 = vmatpush1.msra.mxu0 0.0
        %901 = vmatprep.subr.mxu0 0.0
        %902 = vmatpush1.msra.mxu0 0.0
        %903 = vmatprep.subr.mxu0 0.0
        %904 = vmatpush1.msra.mxu0 0.0
        %905 = vmatprep.subr.mxu0 0.0
        %906 = vmatpush1.msra.mxu0 0.0
        %907 = vmatprep.subr.mxu0 0.0
        %908 = vmatpush1.msra.mxu0 0.0
        %909 = vmatprep.subr.mxu0 0.0
        %910 = vmatpush1.msra.mxu0 0.0
        %911 = vmatprep.subr.mxu0 0.0
        %912 = vmatpush1.msra.mxu0 0.0
        %913 = vmatprep.subr.mxu0 0.0
        %914 = vmatpush1.msra.mxu0 0.0
        %915 = vmatprep.subr.mxu0 0.0
        %916 = vmatpush1.msra.mxu0 0.0
        %917 = vmatprep.subr.mxu0 0.0
        %918 = vmatpush1.msra.mxu0 0.0
        %919 = vmatprep.subr.mxu0 0.0
        %920 = vmatpush1.msra.mxu0 0.0
        %921 = vmatprep.subr.mxu0 0.0
        %922 = vmatpush1.msra.mxu0 0.0
        %923 = vmatprep.subr.mxu0 0.0
        %924 = vmatpush1.msra.mxu0 0.0
        %925 = vmatprep.subr.mxu0 0.0
        %926 = vmatpush1.msra.mxu0 0.0
        %927 = vmatprep.subr.mxu0 0.0
        %928 = vmatpush1.msra.mxu0 0.0
        %929 = vmatprep.subr.mxu0 0.0
        %930 = vmatpush1.msra.mxu0 0.0
        %931 = vmatprep.subr.mxu0 0.0
        %932 = vmatpush1.msra.mxu0 0.0
        %933 = vmatprep.mubr.f32.mxu0 0.0
        %934 = vmatmul.mubr.f32.gmra.mrb[0].mxu0 %v863
        %v935 = vpop.f32.mrb[0].mxu0
        %v936 = vadd.f32 0.0, %v935
        %v937 = vpop.f32.mrb[0].mxu0
        %938 = vdwg.mxu0
        %s939 = ssub.s32 %s43, 1
        %p940 = scmp.gt.s32.totalorder %s939, 0
        %s941 = scalar_select %p940, %s939, 0
        %s942 = smul.u32 %s941, 2
        %s943 = scalar_lea.vmem [#allocation2], %s942
        %v944 = vld [vmem:[%s943] sm:$0x3]
        %v945 = vld [vmem:[%s3] sm:$0xff]
        %v946 = vld [vmem:[%s3 + $0x8] sm:$0xff]
        %v947 = vld [vmem:[%s3 + $0x10] sm:$0xff]
        %v948 = vld [vmem:[%s3 + $0x18] sm:$0xff]
        %v949 = vld [vmem:[%s4] sm:$0xff]
        %v950 = vld [vmem:[%s4 + $0x8] sm:$0xff]
        %v951 = vld [vmem:[%s4 + $0x10] sm:$0xff]
        %v952 = vld [vmem:[%s4 + $0x18] sm:$0xff]
        %vm953 = vcmask 261120
        %v955 = vsel %vm953, %v936, 0
        %957 = vmatprep.subr.mxu0 0.0
        %958 = vmatpush1.msra.mxu0 %v949
        %959 = vmatprep.subr.mxu0 0.0
        %960 = vmatpush1.msra.mxu0 %v950
        %961 = vmatprep.subr.mxu0 0.0
        %962 = vmatpush1.msra.mxu0 %v951
        %963 = vmatprep.subr.mxu0 0.0
        %964 = vmatpush1.msra.mxu0 %v952
        %965 = vmatprep.subr.mxu0 0.0
        %966 = vmatpush1.msra.mxu0 0.0
        %967 = vmatprep.subr.mxu0 0.0
        %968 = vmatpush1.msra.mxu0 0.0
        %969 = vmatprep.subr.mxu0 0.0
        %970 = vmatpush1.msra.mxu0 0.0
        %971 = vmatprep.subr.mxu0 0.0
        %972 = vmatpush1.msra.mxu0 0.0
        %973 = vmatprep.subr.mxu0 0.0
        %974 = vmatpush1.msra.mxu0 0.0
        %975 = vmatprep.subr.mxu0 0.0
        %976 = vmatpush1.msra.mxu0 0.0
        %977 = vmatprep.subr.mxu0 0.0
        %978 = vmatpush1.msra.mxu0 0.0
        %979 = vmatprep.subr.mxu0 0.0
        %980 = vmatpush1.msra.mxu0 0.0
        %981 = vmatprep.subr.mxu0 0.0
        %982 = vmatpush1.msra.mxu0 0.0
        %983 = vmatprep.subr.mxu0 0.0
        %984 = vmatpush1.msra.mxu0 0.0
        %985 = vmatprep.subr.mxu0 0.0
        %986 = vmatpush1.msra.mxu0 0.0
        %987 = vmatprep.subr.mxu0 0.0
        %988 = vmatpush1.msra.mxu0 0.0
        %989 = vmatprep.subr.mxu0 0.0
        %990 = vmatpush1.msra.mxu0 0.0
        %991 = vmatprep.subr.mxu0 0.0
        %992 = vmatpush1.msra.mxu0 0.0
        %993 = vmatprep.subr.mxu0 0.0
        %994 = vmatpush1.msra.mxu0 0.0
        %995 = vmatprep.subr.mxu0 0.0
        %996 = vmatpush1.msra.mxu0 0.0
        %997 = vmatprep.subr.mxu0 0.0
        %998 = vmatpush1.msra.mxu0 0.0
        %999 = vmatprep.subr.mxu0 0.0
        %1000 = vmatpush1.msra.mxu0 0.0
        %1001 = vmatprep.subr.mxu0 0.0
        %1002 = vmatpush1.msra.mxu0 0.0
        %1003 = vmatprep.subr.mxu0 0.0
        %1004 = vmatpush1.msra.mxu0 0.0
        %1005 = vmatprep.subr.mxu0 0.0
        %1006 = vmatpush1.msra.mxu0 0.0
        %1007 = vmatprep.subr.mxu0 0.0
        %1008 = vmatpush1.msra.mxu0 0.0
        %1009 = vmatprep.subr.mxu0 0.0
        %1010 = vmatpush1.msra.mxu0 0.0
        %1011 = vmatprep.subr.mxu0 0.0
        %1012 = vmatpush1.msra.mxu0 0.0
        %1013 = vmatprep.subr.mxu0 0.0
        %1014 = vmatpush1.msra.mxu0 0.0
        %1015 = vmatprep.subr.mxu0 0.0
        %1016 = vmatpush1.msra.mxu0 0.0
        %1017 = vmatprep.subr.mxu0 0.0
        %1018 = vmatpush1.msra.mxu0 0.0
        %1019 = vmatprep.subr.mxu0 0.0
        %1020 = vmatpush1.msra.mxu0 0.0
        %1021 = vmatprep.mubr.f32.mxu0 0.0
        %1022 = vmatmul.mubr.f32.gmra.mrb[0].mxu0 %v955
        %v1023 = vpop.f32.mrb[0].mxu0
        %v1024 = vadd.f32 0.0, %v1023
        %v1025 = vpop.f32.mrb[0].mxu0
        %1026 = vdwg.mxu0
        %v1028 = vsel %vm953, %v829, 0
        %1030 = vmatprep.subr.mxu0 0.0
        %1031 = vmatpush1.msra.mxu0 %v945
        %1032 = vmatprep.subr.mxu0 0.0
        %1033 = vmatpush1.msra.mxu0 %v946
        %1034 = vmatprep.subr.mxu0 0.0
        %1035 = vmatpush1.msra.mxu0 %v947
        %1036 = vmatprep.subr.mxu0 0.0
        %1037 = vmatpush1.msra.mxu0 %v948
        %1038 = vmatprep.subr.mxu0 0.0
        %1039 = vmatpush1.msra.mxu0 0.0
        %1040 = vmatprep.subr.mxu0 0.0
        %1041 = vmatpush1.msra.mxu0 0.0
        %1042 = vmatprep.subr.mxu0 0.0
        %1043 = vmatpush1.msra.mxu0 0.0
        %1044 = vmatprep.subr.mxu0 0.0
        %1045 = vmatpush1.msra.mxu0 0.0
        %1046 = vmatprep.subr.mxu0 0.0
        %1047 = vmatpush1.msra.mxu0 0.0
        %1048 = vmatprep.subr.mxu0 0.0
        %1049 = vmatpush1.msra.mxu0 0.0
        %1050 = vmatprep.subr.mxu0 0.0
        %1051 = vmatpush1.msra.mxu0 0.0
        %1052 = vmatprep.subr.mxu0 0.0
        %1053 = vmatpush1.msra.mxu0 0.0
        %1054 = vmatprep.subr.mxu0 0.0
        %1055 = vmatpush1.msra.mxu0 0.0
        %1056 = vmatprep.subr.mxu0 0.0
        %1057 = vmatpush1.msra.mxu0 0.0
        %1058 = vmatprep.subr.mxu0 0.0
        %1059 = vmatpush1.msra.mxu0 0.0
        %1060 = vmatprep.subr.mxu0 0.0
        %1061 = vmatpush1.msra.mxu0 0.0
        %1062 = vmatprep.subr.mxu0 0.0
        %1063 = vmatpush1.msra.mxu0 0.0
        %1064 = vmatprep.subr.mxu0 0.0
        %1065 = vmatpush1.msra.mxu0 0.0
        %1066 = vmatprep.subr.mxu0 0.0
        %1067 = vmatpush1.msra.mxu0 0.0
        %1068 = vmatprep.subr.mxu0 0.0
        %1069 = vmatpush1.msra.mxu0 0.0
        %1070 = vmatprep.subr.mxu0 0.0
        %1071 = vmatpush1.msra.mxu0 0.0
        %1072 = vmatprep.subr.mxu0 0.0
        %1073 = vmatpush1.msra.mxu0 0.0
        %1074 = vmatprep.subr.mxu0 0.0
        %1075 = vmatpush1.msra.mxu0 0.0
        %1076 = vmatprep.subr.mxu0 0.0
        %1077 = vmatpush1.msra.mxu0 0.0
        %1078 = vmatprep.subr.mxu0 0.0
        %1079 = vmatpush1.msra.mxu0 0.0
        %1080 = vmatprep.subr.mxu0 0.0
        %1081 = vmatpush1.msra.mxu0 0.0
        %1082 = vmatprep.subr.mxu0 0.0
        %1083 = vmatpush1.msra.mxu0 0.0
        %1084 = vmatprep.subr.mxu0 0.0
        %1085 = vmatpush1.msra.mxu0 0.0
        %1086 = vmatprep.subr.mxu0 0.0
        %1087 = vmatpush1.msra.mxu0 0.0
        %1088 = vmatprep.subr.mxu0 0.0
        %1089 = vmatpush1.msra.mxu0 0.0
        %1090 = vmatprep.subr.mxu0 0.0
        %1091 = vmatpush1.msra.mxu0 0.0
        %1092 = vmatprep.subr.mxu0 0.0
        %1093 = vmatpush1.msra.mxu0 0.0
        %1094 = vmatprep.mubr.f32.mxu0 0.0
        %1095 = vmatmul.mubr.f32.gmra.mrb[0].mxu0 %v1028
        %v1096 = vpop.f32.mrb[0].mxu0
        %v1097 = vadd.f32 %v1024, %v1096
        %v1098 = vpop.f32.mrb[0].mxu0
        %1099 = vdwg.mxu0
        %v1100 = vld [vmem:[%s6] sm:$0x1]
        %v1102 = vlaneseq
        %v1103 = vshrl.u32 %v1102, 7
        %v1104 = vsub.s32 0, %v1103
        %v1105 = vrot.slane %v1100, %v1104
        %v1107 = vadd.f32 %v1097, %v1105
        %v1108 = vld [vmem:[#allocation8] sm:$0xff]
        %v1109 = vld [vmem:[#allocation8 + $0x8] sm:$0xff]
        %v1110 = vld [vmem:[#allocation8 + $0x10] sm:$0xff]
        %v1111 = vld [vmem:[#allocation8 + $0x18] sm:$0xff]
        %v1112 = vld [vmem:[#allocation10] sm:$0x1]
        %v1114 = vlaneseq
        %v1115 = vshrl.u32 %v1114, 7
        %v1116 = vsub.s32 0, %v1115
        %v1117 = vrot.slane %v1112, %v1116
        %v1120 = vsel %vm953, %v944, 0
        %1122 = vmatprep.subr.mxu0 0.0
        %1123 = vmatpush1.msra.mxu0 %v1108
        %1124 = vmatprep.subr.mxu0 0.0
        %1125 = vmatpush1.msra.mxu0 %v1109
        %1126 = vmatprep.subr.mxu0 0.0
        %1127 = vmatpush1.msra.mxu0 %v1110
        %1128 = vmatprep.subr.mxu0 0.0
        %1129 = vmatpush1.msra.mxu0 %v1111
        %1130 = vmatprep.subr.mxu0 0.0
        %1131 = vmatpush1.msra.mxu0 0.0
        %1132 = vmatprep.subr.mxu0 0.0
        %1133 = vmatpush1.msra.mxu0 0.0
        %1134 = vmatprep.subr.mxu0 0.0
        %1135 = vmatpush1.msra.mxu0 0.0
        %1136 = vmatprep.subr.mxu0 0.0
        %1137 = vmatpush1.msra.mxu0 0.0
        %1138 = vmatprep.subr.mxu0 0.0
        %1139 = vmatpush1.msra.mxu0 0.0
        %1140 = vmatprep.subr.mxu0 0.0
        %1141 = vmatpush1.msra.mxu0 0.0
        %1142 = vmatprep.subr.mxu0 0.0
        %1143 = vmatpush1.msra.mxu0 0.0
        %1144 = vmatprep.subr.mxu0 0.0
        %1145 = vmatpush1.msra.mxu0 0.0
        %1146 = vmatprep.subr.mxu0 0.0
        %1147 = vmatpush1.msra.mxu0 0.0
        %1148 = vmatprep.subr.mxu0 0.0
        %1149 = vmatpush1.msra.mxu0 0.0
        %1150 = vmatprep.subr.mxu0 0.0
        %1151 = vmatpush1.msra.mxu0 0.0
        %1152 = vmatprep.subr.mxu0 0.0
        %1153 = vmatpush1.msra.mxu0 0.0
        %1154 = vmatprep.subr.mxu0 0.0
        %1155 = vmatpush1.msra.mxu0 0.0
        %1156 = vmatprep.subr.mxu0 0.0
        %1157 = vmatpush1.msra.mxu0 0.0
        %1158 = vmatprep.subr.mxu0 0.0
        %1159 = vmatpush1.msra.mxu0 0.0
        %1160 = vmatprep.subr.mxu0 0.0
        %1161 = vmatpush1.msra.mxu0 0.0
        %1162 = vmatprep.subr.mxu0 0.0
        %1163 = vmatpush1.msra.mxu0 0.0
        %1164 = vmatprep.subr.mxu0 0.0
        %1165 = vmatpush1.msra.mxu0 0.0
        %1166 = vmatprep.subr.mxu0 0.0
        %1167 = vmatpush1.msra.mxu0 0.0
        %1168 = vmatprep.subr.mxu0 0.0
        %1169 = vmatpush1.msra.mxu0 0.0
        %1170 = vmatprep.subr.mxu0 0.0
        %1171 = vmatpush1.msra.mxu0 0.0
        %1172 = vmatprep.subr.mxu0 0.0
        %1173 = vmatpush1.msra.mxu0 0.0
        %1174 = vmatprep.subr.mxu0 0.0
        %1175 = vmatpush1.msra.mxu0 0.0
        %1176 = vmatprep.subr.mxu0 0.0
        %1177 = vmatpush1.msra.mxu0 0.0
        %1178 = vmatprep.subr.mxu0 0.0
        %1179 = vmatpush1.msra.mxu0 0.0
        %1180 = vmatprep.subr.mxu0 0.0
        %1181 = vmatpush1.msra.mxu0 0.0
        %1182 = vmatprep.subr.mxu0 0.0
        %1183 = vmatpush1.msra.mxu0 0.0
        %1184 = vmatprep.subr.mxu0 0.0
        %1185 = vmatpush1.msra.mxu0 0.0
        %1186 = vmatprep.mubr.f32.mxu0 0.0
        %1187 = vmatmul.mubr.f32.gmra.mrb[0].mxu0 %v1120
        %v1188 = vpop.f32.mrb[0].mxu0
        %v1189 = vadd.f32 %v1117, %v1188
        %v1190 = vpop.f32.mrb[0].mxu0
        %1191 = vdwg.mxu0
        %v1192 = vadd.f32 %v1107, %v1189
        %v1193 = vxor.u32 %v1192, 2147483648
        %v1194 = vmul.f32 %v1193, 1.442695
        %v1195 = vpow.pop %v1194
        %v1196 = vadd.f32 %v1195, 1.0
        %v1197 = vrcp.pop %v1196
        %v1198 = vmul.f32 1.0, %v1197
        %1200 = vrot.lane.b32.xlu0 %v1189, 64
        %v1201 = vpop.permute.xlu0 %1200
        %v1203 = vmul.f32 %v1198, %v1201
        %1205 = vrot.lane.b32.xlu0 %v1203, 64
        %v1206 = vpop.permute.xlu0 %1205
        %v1208 = vadd.f32 %v1107, %v1206
        %v1209 = vtanh.pop %v1208
        %v1210 = vsub.f32 1.0, %v1198
        %1212 = vrot.lane.b32.xlu0 %v1209, 96
        %v1213 = vpop.permute.xlu0 %1212
        %v1215 = vmul.f32 %v1210, %v1213
        %1216 = vrot.lane.b32.xlu0 %v944, 32
        %v1217 = vpop.permute.xlu0 %1216
        %v1219 = vmul.f32 %v1198, %v1217
        %v1220 = vadd.f32 %v1215, %v1219
        %1222 = vrot.lane.b32.xlu0 %v1220, 96
        %v1223 = vpop.permute.xlu0 %1222
        %s1225 = smul.u32 %s43, 2
        %s1226 = scalar_lea.vmem [#allocation2], %s1225
        %vm1227 = vcmask 254976
        %1228 = vst.msk [vmem:[%s1226] sm:$0x3] %vm1227, %v1223
        %v1229 = vld [vmem:[#allocation2] sm:$0x3]
        %v1230 = vld [vmem:[#allocation2 + $0x2] sm:$0x3]
        %v1231 = vld [vmem:[#allocation2 + $0x4] sm:$0x3]
        %v1232 = vld [vmem:[#allocation2 + $0x6] sm:$0x3]
        %v1233 = vld [vmem:[#allocation2 + $0x8] sm:$0x3]
        %v1234 = vld [vmem:[#allocation2 + $0xa] sm:$0x3]
        %v1235 = vld [vmem:[#allocation2 + $0xc] sm:$0x3]
        %v1236 = vld [vmem:[#allocation2 + $0xe] sm:$0x3]
        %v1237 = vld [vmem:[#allocation23] sm:$0x1]
        %v1239 = vlaneseq
        %v1240 = vshrl.u32 %v1239, 7
        %v1241 = vsub.s32 0, %v1240
        %v1242 = vrot.slane %v1237, %v1241
        %v1244 = vmul.f32 %v1229, %v1242
        %v1245 = vmul.f32 %v1230, %v1242
        %v1246 = vmul.f32 %v1231, %v1242
        %v1247 = vmul.f32 %v1232, %v1242
        %v1248 = vmul.f32 %v1233, %v1242
        %v1249 = vmul.f32 %v1234, %v1242
        %v1250 = vmul.f32 %v1235, %v1242
        %v1251 = vmul.f32 %v1236, %v1242
        %v1252 = vsel %vm1227, %v1244, 0.0
        %1253 = vadd.xlane.f32.xlu0 %v1252
        %v1254 = vpop.xlane.xlu0 %1253
        %v1255 = vsel %vm1227, %v1245, 0.0
        %1256 = vadd.xlane.f32.xlu0 %v1255
        %v1257 = vpop.xlane.xlu0 %1256
        %v1258 = vsel %vm1227, %v1246, 0.0
        %1259 = vadd.xlane.f32.xlu0 %v1258
        %v1260 = vpop.xlane.xlu0 %1259
        %v1261 = vsel %vm1227, %v1247, 0.0
        %1262 = vadd.xlane.f32.xlu0 %v1261
        %v1263 = vpop.xlane.xlu0 %1262
        %v1264 = vsel %vm1227, %v1248, 0.0
        %1265 = vadd.xlane.f32.xlu0 %v1264
        %v1266 = vpop.xlane.xlu0 %1265
        %v1267 = vsel %vm1227, %v1249, 0.0
        %1268 = vadd.xlane.f32.xlu0 %v1267
        %v1269 = vpop.xlane.xlu0 %1268
        %v1270 = vsel %vm1227, %v1250, 0.0
        %1271 = vadd.xlane.f32.xlu0 %v1270
        %v1272 = vpop.xlane.xlu0 %1271
        %v1273 = vsel %vm1227, %v1251, 0.0
        %1274 = vadd.xlane.f32.xlu0 %v1273
        %v1275 = vpop.xlane.xlu0 %1274
        %v1276 = vstv %s43
        %vm1277 = vcmp.gt.s32.totalorder %v1276, 0
        %vm1278 = vcmp.gt.s32.totalorder %v1276, 1
        %vm1279 = vcmp.gt.s32.totalorder %v1276, 2
        %vm1280 = vcmp.gt.s32.totalorder %v1276, 3
        %vm1281 = vcmp.gt.s32.totalorder %v1276, 4
        %vm1282 = vcmp.gt.s32.totalorder %v1276, 5
        %vm1283 = vcmp.gt.s32.totalorder %v1276, 6
        %vm1284 = vcmp.gt.s32.totalorder %v1276, 7
        %v1285 = vsel %vm1277, %v1254, -1e+30
        %v1286 = vsel %vm1278, %v1257, -1e+30
        %v1287 = vsel %vm1279, %v1260, -1e+30
        %v1288 = vsel %vm1280, %v1263, -1e+30
        %v1289 = vsel %vm1281, %v1266, -1e+30
        %v1290 = vsel %vm1282, %v1269, -1e+30
        %v1291 = vsel %vm1283, %v1272, -1e+30
        %v1292 = vsel %vm1284, %v1275, -1e+30
        %vm1293 = vcmask 1041408
        %v1294 = vsel %vm1293, %v1285, -inf
        %v1295 = vsel %vm1293, %v1286, -inf
        %v1296 = vsel %vm1293, %v1287, -inf
        %v1297 = vsel %vm1293, %v1288, -inf
        %v1298 = vsel %vm1293, %v1289, -inf
        %v1299 = vmax.f32 %v1294, %v1298
        %v1300 = vsel %vm1293, %v1290, -inf
        %v1301 = vmax.f32 %v1295, %v1300
        %v1302 = vsel %vm1293, %v1291, -inf
        %v1303 = vmax.f32 %v1296, %v1302
        %v1304 = vsel %vm1293, %v1292, -inf
        %v1305 = vmax.f32 %v1297, %v1304
        %v1306 = vmax.f32 %v1299, %v1301
        %v1307 = vmax.f32 %v1303, %v1305
        %v1308 = vmax.f32 %v1306, %v1307
        %v1309 = vsub.f32 %v1285, %v1308
        %v1310 = vsub.f32 %v1286, %v1308
        %v1311 = vsub.f32 %v1287, %v1308
        %v1312 = vsub.f32 %v1288, %v1308
        %v1313 = vsub.f32 %v1289, %v1308
        %v1314 = vsub.f32 %v1290, %v1308
        %v1315 = vsub.f32 %v1291, %v1308
        %v1316 = vsub.f32 %v1292, %v1308
        %v1317 = vmul.f32 %v1309, 1.442695
        %v1318 = vpow.pop %v1317
        %v1319 = vmul.f32 %v1310, 1.442695
        %v1320 = vpow.pop %v1319
        %v1321 = vmul.f32 %v1311, 1.442695
        %v1322 = vpow.pop %v1321
        %v1323 = vmul.f32 %v1312, 1.442695
        %v1324 = vpow.pop %v1323
        %v1325 = vmul.f32 %v1313, 1.442695
        %v1326 = vpow.pop %v1325
        %v1327 = vmul.f32 %v1314, 1.442695
        %v1328 = vpow.pop %v1327
        %v1329 = vmul.f32 %v1315, 1.442695
        %v1330 = vpow.pop %v1329
        %v1331 = vmul.f32 %v1316, 1.442695
        %v1332 = vpow.pop %v1331
        %v1333 = vsel %vm1277, 1, 0
        %v1334 = vsel %vm1278, 1, 0
        %v1335 = vsel %vm1279, 1, 0
        %v1336 = vsel %vm1280, 1, 0
        %v1337 = vsel %vm1281, 1, 0
        %v1338 = vsel %vm1282, 1, 0
        %v1339 = vsel %vm1283, 1, 0
        %v1340 = vsel %vm1284, 1, 0
        %v1341 = vcvt.s32.f32 %v1333
        %v1342 = vcvt.s32.f32 %v1334
        %v1343 = vcvt.s32.f32 %v1335
        %v1344 = vcvt.s32.f32 %v1336
        %v1345 = vcvt.s32.f32 %v1337
        %v1346 = vcvt.s32.f32 %v1338
        %v1347 = vcvt.s32.f32 %v1339
        %v1348 = vcvt.s32.f32 %v1340
        %v1349 = vmul.f32 %v1318, %v1341
        %v1350 = vmul.f32 %v1320, %v1342
        %v1351 = vmul.f32 %v1322, %v1343
        %v1352 = vmul.f32 %v1324, %v1344
        %v1353 = vmul.f32 %v1326, %v1345
        %v1354 = vmul.f32 %v1328, %v1346
        %v1355 = vmul.f32 %v1330, %v1347
        %v1356 = vmul.f32 %v1332, %v1348
        %v1357 = vsel %vm1293, %v1349, 0.0
        %v1358 = vsel %vm1293, %v1350, 0.0
        %v1359 = vadd.f32 %v1357, %v1358
        %v1360 = vsel %vm1293, %v1351, 0.0
        %v1361 = vadd.f32 %v1359, %v1360
        %v1362 = vsel %vm1293, %v1352, 0.0
        %v1363 = vadd.f32 %v1361, %v1362
        %v1364 = vsel %vm1293, %v1353, 0.0
        %v1365 = vadd.f32 %v1363, %v1364
        %v1366 = vsel %vm1293, %v1354, 0.0
        %v1367 = vadd.f32 %v1365, %v1366
        %v1368 = vsel %vm1293, %v1355, 0.0
        %v1369 = vadd.f32 %v1367, %v1368
        %v1370 = vsel %vm1293, %v1356, 0.0
        %v1371 = vadd.f32 %v1369, %v1370
        %vm1372 = vcmp.gt.f32.partialorder %v1371, 0.0
        %v1373 = vsel %vm1372, %v1371, 1.0
        %v1374 = vrcp.pop %v1373
        %v1375 = vmul.f32 %v1349, %v1374
        %v1376 = vmul.f32 %v1350, %v1374
        %v1377 = vmul.f32 %v1351, %v1374
        %v1378 = vmul.f32 %v1352, %v1374
        %v1379 = vmul.f32 %v1353, %v1374
        %v1380 = vmul.f32 %v1354, %v1374
        %v1381 = vmul.f32 %v1355, %v1374
        %v1382 = vmul.f32 %v1356, %v1374
        %v1383 = vmul.f32 %v1375, %v1229
        %v1384 = vmul.f32 %v1376, %v1230
        %v1385 = vmul.f32 %v1377, %v1231
        %v1386 = vmul.f32 %v1378, %v1232
        %v1387 = vmul.f32 %v1379, %v1233
        %v1388 = vmul.f32 %v1380, %v1234
        %v1389 = vmul.f32 %v1381, %v1235
        %v1390 = vmul.f32 %v1382, %v1236
        %v1391 = vsel %vm1227, %v1383, 0.0
        %v1392 = vsel %vm1227, %v1384, 0.0
        %v1393 = vadd.f32 %v1391, %v1392
        %v1394 = vsel %vm1227, %v1385, 0.0
        %v1395 = vadd.f32 %v1393, %v1394
        %v1396 = vsel %vm1227, %v1386, 0.0
        %v1397 = vadd.f32 %v1395, %v1396
        %v1398 = vsel %vm1227, %v1387, 0.0
        %v1399 = vadd.f32 %v1397, %v1398
        %v1400 = vsel %vm1227, %v1388, 0.0
        %v1401 = vadd.f32 %v1399, %v1400
        %v1402 = vsel %vm1227, %v1389, 0.0
        %v1403 = vadd.f32 %v1401, %v1402
        %v1404 = vsel %vm1227, %v1390, 0.0
        %v1405 = vadd.f32 %v1403, %v1404
        %vm1406 = vcmask 1024
        %1407 = vst.msk [vmem:[%s812] sm:$0x3] %vm1406, %v1375
        %1408 = vst.msk [vmem:[%s812 + $0x2] sm:$0x3] %vm1406, %v1376
        %1409 = vst.msk [vmem:[%s812 + $0x4] sm:$0x3] %vm1406, %v1377
        %1410 = vst.msk [vmem:[%s812 + $0x6] sm:$0x3] %vm1406, %v1378
        %1411 = vst.msk [vmem:[%s812 + $0x8] sm:$0x3] %vm1406, %v1379
        %1412 = vst.msk [vmem:[%s812 + $0xa] sm:$0x3] %vm1406, %v1380
        %1413 = vst.msk [vmem:[%s812 + $0xc] sm:$0x3] %vm1406, %v1381
        %1414 = vst.msk [vmem:[%s812 + $0xe] sm:$0x3] %vm1406, %v1382
        %v1415 = vld [vmem:[%s8] sm:$0xff]
        %v1416 = vld [vmem:[%s8 + $0x8] sm:$0xff]
        %v1417 = vld [vmem:[%s8 + $0x10] sm:$0xff]
        %v1418 = vld [vmem:[%s8 + $0x18] sm:$0xff]
        %v1419 = vld [vmem:[#allocation11] sm:$0xff]
        %v1420 = vld [vmem:[#allocation11 + $0x8] sm:$0xff]
        %v1421 = vld [vmem:[#allocation11 + $0x10] sm:$0xff]
        %v1422 = vld [vmem:[#allocation11 + $0x18] sm:$0xff]
        %v1424 = vsel %vm953, %v1405, 0
        %1426 = vmatprep.subr.mxu0 0.0
        %1427 = vmatpush1.msra.mxu0 %v1419
        %1428 = vmatprep.subr.mxu0 0.0
        %1429 = vmatpush1.msra.mxu0 %v1420
        %1430 = vmatprep.subr.mxu0 0.0
        %1431 = vmatpush1.msra.mxu0 %v1421
        %1432 = vmatprep.subr.mxu0 0.0
        %1433 = vmatpush1.msra.mxu0 %v1422
        %1434 = vmatprep.subr.mxu0 0.0
        %1435 = vmatpush1.msra.mxu0 0.0
        %1436 = vmatprep.subr.mxu0 0.0
        %1437 = vmatpush1.msra.mxu0 0.0
        %1438 = vmatprep.subr.mxu0 0.0
        %1439 = vmatpush1.msra.mxu0 0.0
        %1440 = vmatprep.subr.mxu0 0.0
        %1441 = vmatpush1.msra.mxu0 0.0
        %1442 = vmatprep.subr.mxu0 0.0
        %1443 = vmatpush1.msra.mxu0 0.0
        %1444 = vmatprep.subr.mxu0 0.0
        %1445 = vmatpush1.msra.mxu0 0.0
        %1446 = vmatprep.subr.mxu0 0.0
        %1447 = vmatpush1.msra.mxu0 0.0
        %1448 = vmatprep.subr.mxu0 0.0
        %1449 = vmatpush1.msra.mxu0 0.0
        %1450 = vmatprep.subr.mxu0 0.0
        %1451 = vmatpush1.msra.mxu0 0.0
        %1452 = vmatprep.subr.mxu0 0.0
        %1453 = vmatpush1.msra.mxu0 0.0
        %1454 = vmatprep.subr.mxu0 0.0
        %1455 = vmatpush1.msra.mxu0 0.0
        %1456 = vmatprep.subr.mxu0 0.0
        %1457 = vmatpush1.msra.mxu0 0.0
        %1458 = vmatprep.subr.mxu0 0.0
        %1459 = vmatpush1.msra.mxu0 0.0
        %1460 = vmatprep.subr.mxu0 0.0
        %1461 = vmatpush1.msra.mxu0 0.0
        %1462 = vmatprep.subr.mxu0 0.0
        %1463 = vmatpush1.msra.mxu0 0.0
        %1464 = vmatprep.subr.mxu0 0.0
        %1465 = vmatpush1.msra.mxu0 0.0
        %1466 = vmatprep.subr.mxu0 0.0
        %1467 = vmatpush1.msra.mxu0 0.0
        %1468 = vmatprep.subr.mxu0 0.0
        %1469 = vmatpush1.msra.mxu0 0.0
        %1470 = vmatprep.subr.mxu0 0.0
        %1471 = vmatpush1.msra.mxu0 0.0
        %1472 = vmatprep.subr.mxu0 0.0
        %1473 = vmatpush1.msra.mxu0 0.0
        %1474 = vmatprep.subr.mxu0 0.0
        %1475 = vmatpush1.msra.mxu0 0.0
        %1476 = vmatprep.subr.mxu0 0.0
        %1477 = vmatpush1.msra.mxu0 0.0
        %1478 = vmatprep.subr.mxu0 0.0
        %1479 = vmatpush1.msra.mxu0 0.0
        %1480 = vmatprep.subr.mxu0 0.0
        %1481 = vmatpush1.msra.mxu0 0.0
        %1482 = vmatprep.subr.mxu0 0.0
        %1483 = vmatpush1.msra.mxu0 0.0
        %1484 = vmatprep.subr.mxu0 0.0
        %1485 = vmatpush1.msra.mxu0 0.0
        %1486 = vmatprep.subr.mxu0 0.0
        %1487 = vmatpush1.msra.mxu0 0.0
        %1488 = vmatprep.subr.mxu0 0.0
        %1489 = vmatpush1.msra.mxu0 0.0
        %1490 = vmatprep.mubr.f32.mxu0 0.0
        %1491 = vmatmul.mubr.f32.gmra.mrb[0].mxu0 %v1424
        %v1492 = vpop.f32.mrb[0].mxu0
        %v1493 = vadd.f32 0.0, %v1492
        %v1494 = vpop.f32.mrb[0].mxu0
        %1495 = vdwg.mxu0
        %1496 = vmatprep.subr.mxu0 0.0
        %1497 = vmatpush1.msra.mxu0 %v1415
        %1498 = vmatprep.subr.mxu0 0.0
        %1499 = vmatpush1.msra.mxu0 %v1416
        %1500 = vmatprep.subr.mxu0 0.0
        %1501 = vmatpush1.msra.mxu0 %v1417
        %1502 = vmatprep.subr.mxu0 0.0
        %1503 = vmatpush1.msra.mxu0 %v1418
        %1504 = vmatprep.subr.mxu0 0.0
        %1505 = vmatpush1.msra.mxu0 0.0
        %1506 = vmatprep.subr.mxu0 0.0
        %1507 = vmatpush1.msra.mxu0 0.0
        %1508 = vmatprep.subr.mxu0 0.0
        %1509 = vmatpush1.msra.mxu0 0.0
        %1510 = vmatprep.subr.mxu0 0.0
        %1511 = vmatpush1.msra.mxu0 0.0
        %1512 = vmatprep.subr.mxu0 0.0
        %1513 = vmatpush1.msra.mxu0 0.0
        %1514 = vmatprep.subr.mxu0 0.0
        %1515 = vmatpush1.msra.mxu0 0.0
        %1516 = vmatprep.subr.mxu0 0.0
        %1517 = vmatpush1.msra.mxu0 0.0
        %1518 = vmatprep.subr.mxu0 0.0
        %1519 = vmatpush1.msra.mxu0 0.0
        %1520 = vmatprep.subr.mxu0 0.0
        %1521 = vmatpush1.msra.mxu0 0.0
        %1522 = vmatprep.subr.mxu0 0.0
        %1523 = vmatpush1.msra.mxu0 0.0
        %1524 = vmatprep.subr.mxu0 0.0
        %1525 = vmatpush1.msra.mxu0 0.0
        %1526 = vmatprep.subr.mxu0 0.0
        %1527 = vmatpush1.msra.mxu0 0.0
        %1528 = vmatprep.subr.mxu0 0.0
        %1529 = vmatpush1.msra.mxu0 0.0
        %1530 = vmatprep.subr.mxu0 0.0
        %1531 = vmatpush1.msra.mxu0 0.0
        %1532 = vmatprep.subr.mxu0 0.0
        %1533 = vmatpush1.msra.mxu0 0.0
        %1534 = vmatprep.subr.mxu0 0.0
        %1535 = vmatpush1.msra.mxu0 0.0
        %1536 = vmatprep.subr.mxu0 0.0
        %1537 = vmatpush1.msra.mxu0 0.0
        %1538 = vmatprep.subr.mxu0 0.0
        %1539 = vmatpush1.msra.mxu0 0.0
        %1540 = vmatprep.subr.mxu0 0.0
        %1541 = vmatpush1.msra.mxu0 0.0
        %1542 = vmatprep.subr.mxu0 0.0
        %1543 = vmatpush1.msra.mxu0 0.0
        %1544 = vmatprep.subr.mxu0 0.0
        %1545 = vmatpush1.msra.mxu0 0.0
        %1546 = vmatprep.subr.mxu0 0.0
        %1547 = vmatpush1.msra.mxu0 0.0
        %1548 = vmatprep.subr.mxu0 0.0
        %1549 = vmatpush1.msra.mxu0 0.0
        %1550 = vmatprep.subr.mxu0 0.0
        %1551 = vmatpush1.msra.mxu0 0.0
        %1552 = vmatprep.subr.mxu0 0.0
        %1553 = vmatpush1.msra.mxu0 0.0
        %1554 = vmatprep.subr.mxu0 0.0
        %1555 = vmatpush1.msra.mxu0 0.0
        %1556 = vmatprep.subr.mxu0 0.0
        %1557 = vmatpush1.msra.mxu0 0.0
        %1558 = vmatprep.subr.mxu0 0.0
        %1559 = vmatpush1.msra.mxu0 0.0
        %1560 = vmatprep.mubr.f32.mxu0 0.0
        %1561 = vmatmul.mubr.f32.gmra.mrb[0].mxu0 %v1028
        %v1562 = vpop.f32.mrb[0].mxu0
        %v1563 = vadd.f32 %v1493, %v1562
        %v1564 = vpop.f32.mrb[0].mxu0
        %1565 = vdwg.mxu0
        %v1566 = vld [vmem:[#allocation14] sm:$0x1]
        %v1568 = vlaneseq
        %v1569 = vshrl.u32 %v1568, 7
        %v1570 = vsub.s32 0, %v1569
        %v1571 = vrot.slane %v1566, %v1570
        %v1573 = vadd.f32 %v1563, %v1571
        %vm1574 = vcmask 15360
        %v1576 = vsel %vm1574, %v860, 0
        %v1579 = vsel %vm1293, %v1573, 0
        %1581 = vmatprep.subr.mxu0 0.0
        %1582 = vmatpush1.msra.mxu0 %v1579
        %1583 = vmatprep.subr.mxu0 0.0
        %1584 = vmatpush1.msra.mxu0 0.0
        %1585 = vmatprep.subr.mxu0 0.0
        %1586 = vmatpush1.msra.mxu0 0.0
        %1587 = vmatprep.subr.mxu0 0.0
        %1588 = vmatpush1.msra.mxu0 0.0
        %1589 = vmatprep.subr.mxu0 0.0
        %1590 = vmatpush1.msra.mxu0 0.0
        %1591 = vmatprep.subr.mxu0 0.0
        %1592 = vmatpush1.msra.mxu0 0.0
        %1593 = vmatprep.subr.mxu0 0.0
        %1594 = vmatpush1.msra.mxu0 0.0
        %1595 = vmatprep.subr.mxu0 0.0
        %1596 = vmatpush1.msra.mxu0 0.0
        %1597 = vmatprep.subr.mxu0 0.0
        %1598 = vmatpush1.msra.mxu0 0.0
        %1599 = vmatprep.subr.mxu0 0.0
        %1600 = vmatpush1.msra.mxu0 0.0
        %1601 = vmatprep.subr.mxu0 0.0
        %1602 = vmatpush1.msra.mxu0 0.0
        %1603 = vmatprep.subr.mxu0 0.0
        %1604 = vmatpush1.msra.mxu0 0.0
        %1605 = vmatprep.subr.mxu0 0.0
        %1606 = vmatpush1.msra.mxu0 0.0
        %1607 = vmatprep.subr.mxu0 0.0
        %1608 = vmatpush1.msra.mxu0 0.0
        %1609 = vmatprep.subr.mxu0 0.0
        %1610 = vmatpush1.msra.mxu0 0.0
        %1611 = vmatprep.subr.mxu0 0.0
        %1612 = vmatpush1.msra.mxu0 0.0
        %1613 = vmatprep.subr.mxu0 0.0
        %1614 = vmatpush1.msra.mxu0 0.0
        %1615 = vmatprep.subr.mxu0 0.0
        %1616 = vmatpush1.msra.mxu0 0.0
        %1617 = vmatprep.subr.mxu0 0.0
        %1618 = vmatpush1.msra.mxu0 0.0
        %1619 = vmatprep.subr.mxu0 0.0
        %1620 = vmatpush1.msra.mxu0 0.0
        %1621 = vmatprep.subr.mxu0 0.0
        %1622 = vmatpush1.msra.mxu0 0.0
        %1623 = vmatprep.subr.mxu0 0.0
        %1624 = vmatpush1.msra.mxu0 0.0
        %1625 = vmatprep.subr.mxu0 0.0
        %1626 = vmatpush1.msra.mxu0 0.0
        %1627 = vmatprep.subr.mxu0 0.0
        %1628 = vmatpush1.msra.mxu0 0.0
        %1629 = vmatprep.subr.mxu0 0.0
        %1630 = vmatpush1.msra.mxu0 0.0
        %1631 = vmatprep.subr.mxu0 0.0
        %1632 = vmatpush1.msra.mxu0 0.0
        %1633 = vmatprep.subr.mxu0 0.0
        %1634 = vmatpush1.msra.mxu0 0.0
        %1635 = vmatprep.subr.mxu0 0.0
        %1636 = vmatpush1.msra.mxu0 0.0
        %1637 = vmatprep.subr.mxu0 0.0
        %1638 = vmatpush1.msra.mxu0 0.0
        %1639 = vmatprep.subr.mxu0 0.0
        %1640 = vmatpush1.msra.mxu0 0.0
        %1641 = vmatprep.subr.mxu0 0.0
        %1642 = vmatpush1.msra.mxu0 0.0
        %1643 = vmatprep.subr.mxu0 0.0
        %1644 = vmatpush1.msra.mxu0 0.0
        %1645 = vmatprep.mubr.f32.mxu0 0.0
        %1646 = vmatmul.mubr.f32.gmra.mrb[0].mxu0 %v1576
        %v1647 = vpop.f32.mrb[0].mxu0
        %v1648 = vadd.f32 0.0, %v1647
        %v1649 = vpop.f32.mrb[0].mxu0
        %1650 = vdwg.mxu0
        %v1651 = vld [vmem:[#allocation13] sm:$0xff]
        %v1652 = vld [vmem:[#allocation13 + $0x8] sm:$0xff]
        %v1653 = vld [vmem:[#allocation13 + $0x10] sm:$0xff]
        %v1654 = vld [vmem:[#allocation13 + $0x18] sm:$0xff]
        %v1655 = vld [vmem:[#allocation16] sm:$0x1]
        %v1657 = vlaneseq
        %v1658 = vshrl.u32 %v1657, 7
        %v1659 = vsub.s32 0, %v1658
        %v1660 = vrot.slane %v1655, %v1659
        %v1662 = vsel %vm953, %v832, 0
        %1664 = vmatprep.subr.mxu0 0.0
        %1665 = vmatpush1.msra.mxu0 %v1651
        %1666 = vmatprep.subr.mxu0 0.0
        %1667 = vmatpush1.msra.mxu0 %v1652
        %1668 = vmatprep.subr.mxu0 0.0
        %1669 = vmatpush1.msra.mxu0 %v1653
        %1670 = vmatprep.subr.mxu0 0.0
        %1671 = vmatpush1.msra.mxu0 %v1654
        %1672 = vmatprep.subr.mxu0 0.0
        %1673 = vmatpush1.msra.mxu0 0.0
        %1674 = vmatprep.subr.mxu0 0.0
        %1675 = vmatpush1.msra.mxu0 0.0
        %1676 = vmatprep.subr.mxu0 0.0
        %1677 = vmatpush1.msra.mxu0 0.0
        %1678 = vmatprep.subr.mxu0 0.0
        %1679 = vmatpush1.msra.mxu0 0.0
        %1680 = vmatprep.subr.mxu0 0.0
        %1681 = vmatpush1.msra.mxu0 0.0
        %1682 = vmatprep.subr.mxu0 0.0
        %1683 = vmatpush1.msra.mxu0 0.0
        %1684 = vmatprep.subr.mxu0 0.0
        %1685 = vmatpush1.msra.mxu0 0.0
        %1686 = vmatprep.subr.mxu0 0.0
        %1687 = vmatpush1.msra.mxu0 0.0
        %1688 = vmatprep.subr.mxu0 0.0
        %1689 = vmatpush1.msra.mxu0 0.0
        %1690 = vmatprep.subr.mxu0 0.0
        %1691 = vmatpush1.msra.mxu0 0.0
        %1692 = vmatprep.subr.mxu0 0.0
        %1693 = vmatpush1.msra.mxu0 0.0
        %1694 = vmatprep.subr.mxu0 0.0
        %1695 = vmatpush1.msra.mxu0 0.0
        %1696 = vmatprep.subr.mxu0 0.0
        %1697 = vmatpush1.msra.mxu0 0.0
        %1698 = vmatprep.subr.mxu0 0.0
        %1699 = vmatpush1.msra.mxu0 0.0
        %1700 = vmatprep.subr.mxu0 0.0
        %1701 = vmatpush1.msra.mxu0 0.0
        %1702 = vmatprep.subr.mxu0 0.0
        %1703 = vmatpush1.msra.mxu0 0.0
        %1704 = vmatprep.subr.mxu0 0.0
        %1705 = vmatpush1.msra.mxu0 0.0
        %1706 = vmatprep.subr.mxu0 0.0
        %1707 = vmatpush1.msra.mxu0 0.0
        %1708 = vmatprep.subr.mxu0 0.0
        %1709 = vmatpush1.msra.mxu0 0.0
        %1710 = vmatprep.subr.mxu0 0.0
        %1711 = vmatpush1.msra.mxu0 0.0
        %1712 = vmatprep.subr.mxu0 0.0
        %1713 = vmatpush1.msra.mxu0 0.0
        %1714 = vmatprep.subr.mxu0 0.0
        %1715 = vmatpush1.msra.mxu0 0.0
        %1716 = vmatprep.subr.mxu0 0.0
        %1717 = vmatpush1.msra.mxu0 0.0
        %1718 = vmatprep.subr.mxu0 0.0
        %1719 = vmatpush1.msra.mxu0 0.0
        %1720 = vmatprep.subr.mxu0 0.0
        %1721 = vmatpush1.msra.mxu0 0.0
        %1722 = vmatprep.subr.mxu0 0.0
        %1723 = vmatpush1.msra.mxu0 0.0
        %1724 = vmatprep.subr.mxu0 0.0
        %1725 = vmatpush1.msra.mxu0 0.0
        %1726 = vmatprep.subr.mxu0 0.0
        %1727 = vmatpush1.msra.mxu0 0.0
        %1728 = vmatprep.mubr.f32.mxu0 0.0
        %1729 = vmatmul.mubr.f32.gmra.mrb[0].mxu0 %v1662
        %v1730 = vpop.f32.mrb[0].mxu0
        %v1731 = vadd.f32 %v1660, %v1730
        %v1732 = vpop.f32.mrb[0].mxu0
        %1733 = vdwg.mxu0
        %v1734 = vadd.f32 %v1648, %v1731
        %v1735 = vxor.u32 %v1734, 2147483648
        %v1736 = vmul.f32 %v1735, 1.442695
        %v1737 = vpow.pop %v1736
        %v1738 = vadd.f32 %v1737, 1.0
        %v1739 = vrcp.pop %v1738
        %v1740 = vmul.f32 1.0, %v1739
        %1742 = vrot.lane.b32.xlu0 %v1731, 64
        %v1743 = vpop.permute.xlu0 %1742
        %v1745 = vmul.f32 %v1740, %v1743
        %1747 = vrot.lane.b32.xlu0 %v1745, 64
        %v1748 = vpop.permute.xlu0 %1747
        %v1750 = vadd.f32 %v1648, %v1748
        %v1751 = vtanh.pop %v1750
        %v1752 = vsub.f32 1.0, %v1740
        %1754 = vrot.lane.b32.xlu0 %v1751, 96
        %v1755 = vpop.permute.xlu0 %1754
        %v1757 = vmul.f32 %v1752, %v1755
        %1758 = vrot.lane.b32.xlu0 %v832, 32
        %v1759 = vpop.permute.xlu0 %1758
        %v1761 = vmul.f32 %v1740, %v1759
        %v1762 = vadd.f32 %v1757, %v1761
        %v1763 = vsub.f32 1.0, %v831
        %1765 = vset.pattern.permute.xlu0 0
        %1766 = vperm.xlu0 %1765, %v1763
        %v1767 = vpop.permute.xlu0 %1766
        %v1769 = vmul.f32 %v832, %v1767
        %1771 = vset.pattern.permute.xlu0 0
        %1772 = vperm.xlu0 %1771, %v831
        %v1773 = vpop.permute.xlu0 %1772
        %v1775 = vmul.f32 %v1762, %v1773
        %1777 = vrot.lane.b32.xlu0 %v1775, 96
        %v1778 = vpop.permute.xlu0 %1777
        %v1780 = vadd.f32 %v1769, %v1778
        %vm1781 = vcmask 257024
        %1782 = vst.msk [vmem:[#allocation3] sm:$0xf] %vm1781, %v1780
        %v1783 = vld [vmem:[#allocation4] sm:$0x3]
        %v1785 = vsel %vm865, %v1780, 0
        %1787 = vmatprep.subr.mxu0 0.0
        %1788 = vmatpush1.msra.mxu0 %v1785
        %1789 = vmatprep.subr.mxu0 0.0
        %1790 = vmatpush1.msra.mxu0 0.0
        %1791 = vmatprep.subr.mxu0 0.0
        %1792 = vmatpush1.msra.mxu0 0.0
        %1793 = vmatprep.subr.mxu0 0.0
        %1794 = vmatpush1.msra.mxu0 0.0
        %1795 = vmatprep.subr.mxu0 0.0
        %1796 = vmatpush1.msra.mxu0 0.0
        %1797 = vmatprep.subr.mxu0 0.0
        %1798 = vmatpush1.msra.mxu0 0.0
        %1799 = vmatprep.subr.mxu0 0.0
        %1800 = vmatpush1.msra.mxu0 0.0
        %1801 = vmatprep.subr.mxu0 0.0
        %1802 = vmatpush1.msra.mxu0 0.0
        %1803 = vmatprep.subr.mxu0 0.0
        %1804 = vmatpush1.msra.mxu0 0.0
        %1805 = vmatprep.subr.mxu0 0.0
        %1806 = vmatpush1.msra.mxu0 0.0
        %1807 = vmatprep.subr.mxu0 0.0
        %1808 = vmatpush1.msra.mxu0 0.0
        %1809 = vmatprep.subr.mxu0 0.0
        %1810 = vmatpush1.msra.mxu0 0.0
        %1811 = vmatprep.subr.mxu0 0.0
        %1812 = vmatpush1.msra.mxu0 0.0
        %1813 = vmatprep.subr.mxu0 0.0
        %1814 = vmatpush1.msra.mxu0 0.0
        %1815 = vmatprep.subr.mxu0 0.0
        %1816 = vmatpush1.msra.mxu0 0.0
        %1817 = vmatprep.subr.mxu0 0.0
        %1818 = vmatpush1.msra.mxu0 0.0
        %1819 = vmatprep.subr.mxu0 0.0
        %1820 = vmatpush1.msra.mxu0 0.0
        %1821 = vmatprep.subr.mxu0 0.0
        %1822 = vmatpush1.msra.mxu0 0.0
        %1823 = vmatprep.subr.mxu0 0.0
        %1824 = vmatpush1.msra.mxu0 0.0
        %1825 = vmatprep.subr.mxu0 0.0
        %1826 = vmatpush1.msra.mxu0 0.0
        %1827 = vmatprep.subr.mxu0 0.0
        %1828 = vmatpush1.msra.mxu0 0.0
        %1829 = vmatprep.subr.mxu0 0.0
        %1830 = vmatpush1.msra.mxu0 0.0
        %1831 = vmatprep.subr.mxu0 0.0
        %1832 = vmatpush1.msra.mxu0 0.0
        %1833 = vmatprep.subr.mxu0 0.0
        %1834 = vmatpush1.msra.mxu0 0.0
        %1835 = vmatprep.subr.mxu0 0.0
        %1836 = vmatpush1.msra.mxu0 0.0
        %1837 = vmatprep.subr.mxu0 0.0
        %1838 = vmatpush1.msra.mxu0 0.0
        %1839 = vmatprep.subr.mxu0 0.0
        %1840 = vmatpush1.msra.mxu0 0.0
        %1841 = vmatprep.subr.mxu0 0.0
        %1842 = vmatpush1.msra.mxu0 0.0
        %1843 = vmatprep.subr.mxu0 0.0
        %1844 = vmatpush1.msra.mxu0 0.0
        %1845 = vmatprep.subr.mxu0 0.0
        %1846 = vmatpush1.msra.mxu0 0.0
        %1847 = vmatprep.subr.mxu0 0.0
        %1848 = vmatpush1.msra.mxu0 0.0
        %1849 = vmatprep.subr.mxu0 0.0
        %1850 = vmatpush1.msra.mxu0 0.0
        %1851 = vmatprep.mubr.f32.mxu0 0.0
        %1852 = vmatmul.mubr.f32.gmra.mrb[0].mxu0 %v863
        %v1853 = vpop.f32.mrb[0].mxu0
        %v1854 = vadd.f32 0.0, %v1853
        %v1855 = vpop.f32.mrb[0].mxu0
        %1856 = vdwg.mxu0
        %v1857 = vld [vmem:[#allocation17] sm:$0xff]
        %v1858 = vld [vmem:[#allocation17 + $0x8] sm:$0xff]
        %v1859 = vld [vmem:[#allocation17 + $0x10] sm:$0xff]
        %v1860 = vld [vmem:[#allocation17 + $0x18] sm:$0xff]
        %v1861 = vld [vmem:[#allocation20] sm:$0x1]
        %v1863 = vlaneseq
        %v1864 = vshrl.u32 %v1863, 7
        %v1865 = vsub.s32 0, %v1864
        %v1866 = vrot.slane %v1861, %v1865
        %v1869 = vsel %vm953, %v1854, 0
        %1871 = vmatprep.subr.mxu0 0.0
        %1872 = vmatpush1.msra.mxu0 %v1857
        %1873 = vmatprep.subr.mxu0 0.0
        %1874 = vmatpush1.msra.mxu0 %v1858
        %1875 = vmatprep.subr.mxu0 0.0
        %1876 = vmatpush1.msra.mxu0 %v1859
        %1877 = vmatprep.subr.mxu0 0.0
        %1878 = vmatpush1.msra.mxu0 %v1860
        %1879 = vmatprep.subr.mxu0 0.0
        %1880 = vmatpush1.msra.mxu0 0.0
        %1881 = vmatprep.subr.mxu0 0.0
        %1882 = vmatpush1.msra.mxu0 0.0
        %1883 = vmatprep.subr.mxu0 0.0
        %1884 = vmatpush1.msra.mxu0 0.0
        %1885 = vmatprep.subr.mxu0 0.0
        %1886 = vmatpush1.msra.mxu0 0.0
        %1887 = vmatprep.subr.mxu0 0.0
        %1888 = vmatpush1.msra.mxu0 0.0
        %1889 = vmatprep.subr.mxu0 0.0
        %1890 = vmatpush1.msra.mxu0 0.0
        %1891 = vmatprep.subr.mxu0 0.0
        %1892 = vmatpush1.msra.mxu0 0.0
        %1893 = vmatprep.subr.mxu0 0.0
        %1894 = vmatpush1.msra.mxu0 0.0
        %1895 = vmatprep.subr.mxu0 0.0
        %1896 = vmatpush1.msra.mxu0 0.0
        %1897 = vmatprep.subr.mxu0 0.0
        %1898 = vmatpush1.msra.mxu0 0.0
        %1899 = vmatprep.subr.mxu0 0.0
        %1900 = vmatpush1.msra.mxu0 0.0
        %1901 = vmatprep.subr.mxu0 0.0
        %1902 = vmatpush1.msra.mxu0 0.0
        %1903 = vmatprep.subr.mxu0 0.0
        %1904 = vmatpush1.msra.mxu0 0.0
        %1905 = vmatprep.subr.mxu0 0.0
        %1906 = vmatpush1.msra.mxu0 0.0
        %1907 = vmatprep.subr.mxu0 0.0
        %1908 = vmatpush1.msra.mxu0 0.0
        %1909 = vmatprep.subr.mxu0 0.0
        %1910 = vmatpush1.msra.mxu0 0.0
        %1911 = vmatprep.subr.mxu0 0.0
        %1912 = vmatpush1.msra.mxu0 0.0
        %1913 = vmatprep.subr.mxu0 0.0
        %1914 = vmatpush1.msra.mxu0 0.0
        %1915 = vmatprep.subr.mxu0 0.0
        %1916 = vmatpush1.msra.mxu0 0.0
        %1917 = vmatprep.subr.mxu0 0.0
        %1918 = vmatpush1.msra.mxu0 0.0
        %1919 = vmatprep.subr.mxu0 0.0
        %1920 = vmatpush1.msra.mxu0 0.0
        %1921 = vmatprep.subr.mxu0 0.0
        %1922 = vmatpush1.msra.mxu0 0.0
        %1923 = vmatprep.subr.mxu0 0.0
        %1924 = vmatpush1.msra.mxu0 0.0
        %1925 = vmatprep.subr.mxu0 0.0
        %1926 = vmatpush1.msra.mxu0 0.0
        %1927 = vmatprep.subr.mxu0 0.0
        %1928 = vmatpush1.msra.mxu0 0.0
        %1929 = vmatprep.subr.mxu0 0.0
        %1930 = vmatpush1.msra.mxu0 0.0
        %1931 = vmatprep.subr.mxu0 0.0
        %1932 = vmatpush1.msra.mxu0 0.0
        %1933 = vmatprep.subr.mxu0 0.0
        %1934 = vmatpush1.msra.mxu0 0.0
        %1935 = vmatprep.mubr.f32.mxu0 0.0
        %1936 = vmatmul.mubr.f32.gmra.mrb[0].mxu0 %v1869
        %v1937 = vpop.f32.mrb[0].mxu0
        %v1938 = vadd.f32 %v1866, %v1937
        %v1939 = vpop.f32.mrb[0].mxu0
        %1940 = vdwg.mxu0
        %v1941 = vld [vmem:[#allocation19] sm:$0xff]
        %v1942 = vld [vmem:[#allocation19 + $0x8] sm:$0xff]
        %v1943 = vld [vmem:[#allocation19 + $0x10] sm:$0xff]
        %v1944 = vld [vmem:[#allocation19 + $0x18] sm:$0xff]
        %v1945 = vld [vmem:[#allocation22] sm:$0x1]
        %v1947 = vlaneseq
        %v1948 = vshrl.u32 %v1947, 7
        %v1949 = vsub.s32 0, %v1948
        %v1950 = vrot.slane %v1945, %v1949
        %v1953 = vsel %vm953, %v1783, 0
        %1955 = vmatprep.subr.mxu0 0.0
        %1956 = vmatpush1.msra.mxu0 %v1941
        %1957 = vmatprep.subr.mxu0 0.0
        %1958 = vmatpush1.msra.mxu0 %v1942
        %1959 = vmatprep.subr.mxu0 0.0
        %1960 = vmatpush1.msra.mxu0 %v1943
        %1961 = vmatprep.subr.mxu0 0.0
        %1962 = vmatpush1.msra.mxu0 %v1944
        %1963 = vmatprep.subr.mxu0 0.0
        %1964 = vmatpush1.msra.mxu0 0.0
        %1965 = vmatprep.subr.mxu0 0.0
        %1966 = vmatpush1.msra.mxu0 0.0
        %1967 = vmatprep.subr.mxu0 0.0
        %1968 = vmatpush1.msra.mxu0 0.0
        %1969 = vmatprep.subr.mxu0 0.0
        %1970 = vmatpush1.msra.mxu0 0.0
        %1971 = vmatprep.subr.mxu0 0.0
        %1972 = vmatpush1.msra.mxu0 0.0
        %1973 = vmatprep.subr.mxu0 0.0
        %1974 = vmatpush1.msra.mxu0 0.0
        %1975 = vmatprep.subr.mxu0 0.0
        %1976 = vmatpush1.msra.mxu0 0.0
        %1977 = vmatprep.subr.mxu0 0.0
        %1978 = vmatpush1.msra.mxu0 0.0
        %1979 = vmatprep.subr.mxu0 0.0
        %1980 = vmatpush1.msra.mxu0 0.0
        %1981 = vmatprep.subr.mxu0 0.0
        %1982 = vmatpush1.msra.mxu0 0.0
        %1983 = vmatprep.subr.mxu0 0.0
        %1984 = vmatpush1.msra.mxu0 0.0
        %1985 = vmatprep.subr.mxu0 0.0
        %1986 = vmatpush1.msra.mxu0 0.0
        %1987 = vmatprep.subr.mxu0 0.0
        %1988 = vmatpush1.msra.mxu0 0.0
        %1989 = vmatprep.subr.mxu0 0.0
        %1990 = vmatpush1.msra.mxu0 0.0
        %1991 = vmatprep.subr.mxu0 0.0
        %1992 = vmatpush1.msra.mxu0 0.0
        %1993 = vmatprep.subr.mxu0 0.0
        %1994 = vmatpush1.msra.mxu0 0.0
        %1995 = vmatprep.subr.mxu0 0.0
        %1996 = vmatpush1.msra.mxu0 0.0
        %1997 = vmatprep.subr.mxu0 0.0
        %1998 = vmatpush1.msra.mxu0 0.0
        %1999 = vmatprep.subr.mxu0 0.0
        %2000 = vmatpush1.msra.mxu0 0.0
        %2001 = vmatprep.subr.mxu0 0.0
        %2002 = vmatpush1.msra.mxu0 0.0
        %2003 = vmatprep.subr.mxu0 0.0
        %2004 = vmatpush1.msra.mxu0 0.0
        %2005 = vmatprep.subr.mxu0 0.0
        %2006 = vmatpush1.msra.mxu0 0.0
        %2007 = vmatprep.subr.mxu0 0.0
        %2008 = vmatpush1.msra.mxu0 0.0
        %2009 = vmatprep.subr.mxu0 0.0
        %2010 = vmatpush1.msra.mxu0 0.0
        %2011 = vmatprep.subr.mxu0 0.0
        %2012 = vmatpush1.msra.mxu0 0.0
        %2013 = vmatprep.subr.mxu0 0.0
        %2014 = vmatpush1.msra.mxu0 0.0
        %2015 = vmatprep.subr.mxu0 0.0
        %2016 = vmatpush1.msra.mxu0 0.0
        %2017 = vmatprep.subr.mxu0 0.0
        %2018 = vmatpush1.msra.mxu0 0.0
        %2019 = vmatprep.mubr.f32.mxu0 0.0
        %2020 = vmatmul.mubr.f32.gmra.mrb[0].mxu0 %v1953
        %v2021 = vpop.f32.mrb[0].mxu0
        %v2022 = vadd.f32 %v1950, %v2021
        %v2023 = vpop.f32.mrb[0].mxu0
        %2024 = vdwg.mxu0
        %v2025 = vadd.f32 %v1938, %v2022
        %v2026 = vxor.u32 %v2025, 2147483648
        %v2027 = vmul.f32 %v2026, 1.442695
        %v2028 = vpow.pop %v2027
        %v2029 = vadd.f32 %v2028, 1.0
        %v2030 = vrcp.pop %v2029
        %v2031 = vmul.f32 1.0, %v2030
        %2033 = vrot.lane.b32.xlu0 %v2022, 64
        %v2034 = vpop.permute.xlu0 %2033
        %v2036 = vmul.f32 %v2031, %v2034
        %2038 = vrot.lane.b32.xlu0 %v2036, 64
        %v2039 = vpop.permute.xlu0 %2038
        %v2041 = vadd.f32 %v1938, %v2039
        %v2042 = vtanh.pop %v2041
        %v2043 = vsub.f32 1.0, %v2031
        %2045 = vrot.lane.b32.xlu0 %v2042, 96
        %v2046 = vpop.permute.xlu0 %2045
        %v2048 = vmul.f32 %v2043, %v2046
        %2049 = vrot.lane.b32.xlu0 %v1783, 32
        %v2050 = vpop.permute.xlu0 %2049
        %v2052 = vmul.f32 %v2031, %v2050
        %v2053 = vadd.f32 %v2048, %v2052
        %2055 = vrot.lane.b32.xlu0 %v2053, 96
        %v2056 = vpop.permute.xlu0 %2055
        %2058 = vst.msk [vmem:[#allocation4] sm:$0x3] %vm1227, %v2056
        %2059 = vst.msk [vmem:[%s792] sm:$0x3] %vm1227, %v2056
        %s2060 = sand.u32 %s444, 1
        %s2061 = scalar_lea.sflag [#allocation7], %s2060
        %s2062 = sand.u32 %s444, 1
        %s2063 = smul.addr %s2062, 2
        %s2064 = scalar_lea.vmem [#allocation25], %s2063
        %p2065 = scmp.lt.s32.totalorder %s43, 7
        %s2066 = scalar_select %p2065, %s43, 7
        %s2067 = smul.addr %s2066, 8
        %s2068 = smul.addr %s2067, 2
        %s2069 = scalar_lea.vmem %s19, %s2068
        // Predicated region
        $region145: #{dialogue_rnn_forward.1} parent=91 // pred_check
          %p2070 = pneg %p454
        $region146: #{dialogue_rnn_forward.1} parent=91 // pred_check_branch
          %2072 = sbr.rel (%p2070) target = $region148
        $region147: #{dialogue_rnn_forward.1} parent=91 // pred_region
          %s2074 = ssub.s32 32, 32
          %2075 = vsyncadd %s2061, %s2074
          %s2076 = smul.addr %s43, 32
          %s2077 = scalar_lea.hbm %s18, %s2076
          %s2079 = sshll.u32 %s2064, 4
          %s2080 = int_to_ptr.vmem [resolvable:$true] %s2079
          %2082 = dma.vmem_to_hbm [thread:$0]  %s2080, 32, %s2077, %s2061
        $region148: #{dialogue_rnn_forward.1} parent=91 // pred_fallthru
          _
        // Predicated region
        $region149: #{dialogue_rnn_forward.1} parent=91 // pred_check
          %p2083 = pneg %p480
        $region150: #{dialogue_rnn_forward.1} parent=91 // pred_check_branch
          %2085 = sbr.rel (%p2083) target = $region152
        $region151: #{dialogue_rnn_forward.1} parent=91 // pred_region
          _
        $region152: #{dialogue_rnn_forward.1} parent=91 // pred_fallthru
          _
      $region92: #{dialogue_rnn_forward.1} parent=5 // pred_fallthru
        _
      %p2086 = scmp.le.s32.totalorder 2, %s38
      // Predicated region
      $region153: #{dialogue_rnn_forward.1} parent=5 // pred_check
        %p2087 = pneg %p2086
      $region154: #{dialogue_rnn_forward.1} parent=5 // pred_check_branch
        %2089 = sbr.rel (%p2087) target = $region156
      $region155: #{dialogue_rnn_forward.1} parent=5 // pred_region
        %s2090 = ssub.s32 %s38, 2
        // Predicated region
        $region157: #{dialogue_rnn_forward.1} parent=155 // pred_check
          %p2091 = pneg %p460
        $region158: #{dialogue_rnn_forward.1} parent=155 // pred_check_branch
          %2093 = sbr.rel (%p2091) target = $region160
        $region159: #{dialogue_rnn_forward.1} parent=155 // pred_region
          %s2094 = sand.u32 %s445, 1
          %s2095 = scalar_lea.sflag [#allocation7], %s2094
          %s2096 = sand.u32 %s445, 1
          %s2097 = smul.addr %s2096, 2
          %s2098 = scalar_lea.vmem [#allocation25], %s2097
          %2099 = dma.done %s2095, 32
        $region160: #{dialogue_rnn_forward.1} parent=155 // pred_fallthru
          _
        // Predicated region
        $region161: #{dialogue_rnn_forward.1} parent=155 // pred_check
          %p2100 = pneg %p486
        $region162: #{dialogue_rnn_forward.1} parent=155 // pred_check_branch
          %2102 = sbr.rel (%p2100) target = $region164
        $region163: #{dialogue_rnn_forward.1} parent=155 // pred_region
          %p2103 = scmp.lt.s32.totalorder %s44, 7
          %s2104 = scalar_select %p2103, %s44, 7
          %s2105 = smul.addr %s2104, 8
          %s2106 = smul.addr %s2105, 2
          %s2107 = scalar_lea.vmem %s19, %s2106
        $region164: #{dialogue_rnn_forward.1} parent=155 // pred_fallthru
          _
      $region156: #{dialogue_rnn_forward.1} parent=5 // pred_fallthru
        _
    $region6: #{dialogue_rnn_forward.1} parent=1 // loop_footer
      %s42 = sadd.s32 1, %s38
    $region7: #{dialogue_rnn_forward.1} parent=1 // loop_footer_branch
      %37 = sbr.rel target = $region3
    $region8: #{dialogue_rnn_forward.1} parent=1 // loop_exit
      _
    %2108 = vsyncpa [#allocation6], 1
    %s2109 = scalar_lea.sflag [#allocation6], 1
    %2110 = vsyncpa %s2109, 1
    %2111 = vsyncpa [#allocation9], 1
    %2112 = vsyncpa [#allocation12], 1
    %2113 = vsyncpa [#allocation15], 1
    %2114 = vsyncpa [#allocation18], 1
    %2115 = vsyncpa [#allocation21], 1
    %2116 = vsyncpa [#allocation24], 1
    %2117 = vsyncpa [#allocation7], 1
    %s2118 = scalar_lea.sflag [#allocation7], 1
    %2119 = vsyncpa %s2118, 1

</llo_original>
